<compile_context>
chip_gen: v7x
topology: tpu7x:2x2x1
jax: 0.10.0
libtpu: 0.0.40
codegen_flags: <defaults>
</compile_context>

<pallas_src>
import functools

import jax
import jax.numpy as jnp
from jax.experimental import pallas as pl
from jax.experimental.pallas import tpu as pltpu


def _round_up(n, m):
    return ((n + m - 1) // m) * m


def _param_actor_kernel(num_hidden, x_ref, w_ref, b_ref, wt_ref, o_ref):
    """x_ref: (TB, F); w_ref: (num_hidden, F, F); b_ref: (num_hidden+1, 1, F);
    wt_ref: (2F, F) fused [w_out ; w_pass]; o_ref: (TB, F)."""
    x = x_ref[...]
    x_copy = x

    for i in range(num_hidden):
        w = w_ref[i]          # (F, F), zero-padded
        b = b_ref[i]          # (1, F), zero-padded
        x = jnp.maximum(
            jnp.dot(
                x, w,
                preferred_element_type=jnp.float32,
                precision=jax.lax.Precision.HIGHEST,
            )
            + b,
            0.0,
        )

    # Fused epilogue: [hidden_act | x_copy] @ [w_out ; w_pass] + (b_out + b_pass)
    cat = jnp.concatenate([x, x_copy], axis=1)      # (TB, 2F), lane-aligned concat
    out = (
        jnp.dot(
            cat, wt_ref[...],
            preferred_element_type=jnp.float32,
            precision=jax.lax.Precision.HIGHEST,
        )
        + b_ref[num_hidden]
    )
    o_ref[...] = out.astype(o_ref.dtype)


def param_actor_forward(x, hidden_params, w_out, b_out, w_pass, b_pass,
                        row_tile=None):
    """x: (B, state_size) f32. hidden_params: list of (w, b) with w (in, out), b (1, out).
    w_out: (last_hidden, P), w_pass: (state_size, P)."""
    num_hidden = len(hidden_params)
    assert num_hidden >= 1, "at least one hidden layer expected"

    B, S = x.shape
    P = w_out.shape[1]
    last_hidden = hidden_params[-1][0].shape[1]

    # Uniform padded feature width (lane-dense, (8,128)-aligned everywhere).
    all_dims = [S, P] + [w.shape[1] for w, _ in hidden_params]
    F = max(128, _round_up(max(all_dims), 128))

    # ---- host-side packing into a few zero-padded slabs ------------------
    w_list, b_list = [], []
    for (w, b) in hidden_params:
        wp = jnp.zeros((F, F), jnp.float32).at[: w.shape[0], : w.shape[1]].set(w)
        bp = jnp.zeros((1, F), jnp.float32).at[:, : b.shape[-1]].set(
            b.reshape(1, -1)
        )
        w_list.append(wp)
        b_list.append(bp)
    W_slab = jnp.stack(w_list, axis=0)                      # (num_hidden, F, F)

    # Fused tail weight: rows [0:last_hidden] <- w_out, rows [F:F+S] <- w_pass.
    w_tail = jnp.zeros((2 * F, F), jnp.float32)
    w_tail = w_tail.at[:last_hidden, :P].set(w_out)
    w_tail = w_tail.at[F : F + S, :P].set(w_pass)
    b_tail = jnp.zeros((1, F), jnp.float32).at[:, :P].set(
        (b_out + b_pass).reshape(1, -1)
    )
    B_slab = jnp.stack(b_list + [b_tail], axis=0)           # (num_hidden+1, 1, F)

    # ---- batch tiling ------------------------------------------------------
    TB = row_tile if row_tile is not None else min(512, _round_up(B, 8))
    B_pad = _round_up(B, TB)
    x_pad = jnp.zeros((B_pad, F), jnp.float32).at[:B, :S].set(x)
    grid = (B_pad // TB,)

    # ---- cost estimate (advisory) -----------------------------------------
    flops_per_row = 0
    k = S
    for (w, _) in hidden_params:
        flops_per_row += 2 * k * w.shape[1]
        k = w.shape[1]
    flops_per_row += 2 * (k + S) * P
    bytes_accessed = 4 * (
        x_pad.size + W_slab.size + B_slab.size + w_tail.size + B_pad * F
    )
    cost = pl.CostEstimate(
        flops=int(flops_per_row * B),
        transcendentals=0,
        bytes_accessed=int(bytes_accessed),
    )

    kernel = functools.partial(_param_actor_kernel, num_hidden)

    out_pad = pl.pallas_call(
        kernel,
        out_shape=jax.ShapeDtypeStruct((B_pad, F), jnp.float32),
        grid_spec=pltpu.PrefetchScalarGridSpec(
            num_scalar_prefetch=0,
            grid=grid,
            in_specs=[
                pl.BlockSpec((TB, F), lambda i: (i, 0)),                    # x rows
                pl.BlockSpec((num_hidden, F, F), lambda i: (0, 0, 0)),      # hidden W
                pl.BlockSpec((num_hidden + 1, 1, F), lambda i: (0, 0, 0)),  # biases
                pl.BlockSpec((2 * F, F), lambda i: (0, 0)),                 # fused tail W
            ],
            out_specs=pl.BlockSpec((TB, F), lambda i: (i, 0)),
        ),
        compiler_params=pltpu.CompilerParams(
            dimension_semantics=("parallel",),
        ),
        cost_estimate=cost,
    )(x_pad, W_slab, B_slab, w_tail)

    return out_pad[:B, :P]


def init_param_actor_params(
    key,
    state_size,
    action_parameter_size,
    hidden_layers,
    output_layer_init_std=None,
):
    """Deterministic init mirroring ParamActor.__init__ (kaiming-normal hidden,
    zero biases, zero/normal output layer, zero passthrough layer)."""
    hidden_params = []
    in_size = state_size
    for h in hidden_layers:
        key, k = jax.random.split(key)
        # kaiming_normal_(nonlinearity='relu'): std = sqrt(2 / fan_in)
        std = jnp.sqrt(2.0 / in_size).astype(jnp.float32)
        w = jax.random.normal(k, (in_size, h), dtype=jnp.float32) * std
        b = jnp.zeros((1, h), dtype=jnp.float32)
        hidden_params.append((w, b))
        in_size = h

    last = in_size
    if output_layer_init_std is not None:
        key, k = jax.random.split(key)
        w_out = (
            jax.random.normal(k, (last, action_parameter_size), dtype=jnp.float32)
            * output_layer_init_std
        )
    else:
        w_out = jnp.zeros((last, action_parameter_size), dtype=jnp.float32)
    b_out = jnp.zeros((1, action_parameter_size), dtype=jnp.float32)

    # passthrough layer: zero-initialized, frozen
    w_pass = jnp.zeros((state_size, action_parameter_size), dtype=jnp.float32)
    b_pass = jnp.zeros((1, action_parameter_size), dtype=jnp.float32)

    return hidden_params, w_out, b_out, w_pass, b_pass


def _ref_forward(x, hidden_params, w_out, b_out, w_pass, b_pass):
    hi = jax.lax.Precision.HIGHEST
    x_copy = x
    for w, b in hidden_params:
        x = jnp.maximum(jnp.dot(x, w, precision=hi) + b, 0.0)
    out = jnp.dot(x, w_out, precision=hi) + b_out
    out = out + jnp.dot(x_copy, w_pass, precision=hi) + b_pass
    return out


if __name__ == "__main__":
    # Module config (small, consistent with ParamActor's forward)
    batch = 8
    state_size = 16
    action_parameter_size = 8
    hidden_layers = (32, 32)

    key = jax.random.PRNGKey(0)
    key, kx = jax.random.split(key)
    x = jax.random.normal(kx, (batch, state_size), dtype=jnp.float32)

    params = init_param_actor_params(
        key,
        state_size,
        action_parameter_size,
        hidden_layers,
        output_layer_init_std=0.1,  # nonzero so the output isn't trivially zero
    )

    out = param_actor_forward(x, *params)
    out = jax.block_until_ready(out)

    # Sanity check against pure-JAX reference (same HIGHEST-precision dots).
    ref = _ref_forward(x, *params)
    assert out.shape == (batch, action_parameter_size)
    assert jnp.allclose(out, ref, atol=1e-5, rtol=1e-5)

    print("KERNEL_OK")
</pallas_src>

<mosaic_0001>
module attributes {stable_mosaic.version = 11 : i64} {
  func.func @_param_actor_kernel(%arg0: i32, %arg1: memref<8x128xf32, #tpu.memory_space<vmem>>, %arg2: memref<2x128x128xf32, #tpu.memory_space<vmem>>, %arg3: memref<3x1x128xf32, #tpu.memory_space<vmem>>, %arg4: memref<256x128xf32, #tpu.memory_space<vmem>>, %arg5: memref<8x128xf32, #tpu.memory_space<vmem>>) attributes {dimension_semantics = [#tpu.dimension_semantics<parallel>], iteration_bounds = array<i64: 1>, scalar_prefetch = 0 : i64, scratch_operands = 0 : i64, tpu.core_type = #tpu.core_type<tc>, window_params = [{transform_indices = @transform_0, window_bounds = array<i64: 8, 128>}, {pipeline_mode = #tpu.pipeline_mode<synchronous>, transform_indices = @transform_1, window_bounds = array<i64: 2, 128, 128>}, {pipeline_mode = #tpu.pipeline_mode<synchronous>, transform_indices = @transform_2, window_bounds = array<i64: 3, 1, 128>}, {pipeline_mode = #tpu.pipeline_mode<synchronous>, transform_indices = @transform_3, window_bounds = array<i64: 256, 128>}, {transform_indices = @transform_4, window_bounds = array<i64: 8, 128>}]} {
    %c0 = arith.constant 0 : index
    %c0_0 = arith.constant 0 : index
    %0 = vector.load %arg1[%c0, %c0_0] : memref<8x128xf32, #tpu.memory_space<vmem>>, vector<8x128xf32>
    %c0_1 = arith.constant 0 : index
    %c0_2 = arith.constant 0 : index
    %c0_3 = arith.constant 0 : index
    %1 = vector.load %arg2[%c0_1, %c0_2, %c0_3] : memref<2x128x128xf32, #tpu.memory_space<vmem>>, vector<1x128x128xf32>
    %2 = vector.shape_cast %1 : vector<1x128x128xf32> to vector<128x128xf32>
    %c0_4 = arith.constant 0 : index
    %c0_5 = arith.constant 0 : index
    %c0_6 = arith.constant 0 : index
    %3 = vector.load %arg3[%c0_4, %c0_5, %c0_6] : memref<3x1x128xf32, #tpu.memory_space<vmem>>, vector<1x1x128xf32>
    %4 = vector.shape_cast %3 : vector<1x1x128xf32> to vector<1x128xf32>
    %cst = arith.constant dense<0.000000e+00> : vector<8x128xf32>
    %5 = tpu.matmul %0, %2, %cst {dimension_numbers = #tpu.dot_dimension_numbers<[1], [0], [0], [1], [0, 0, 1, 1], [], []>, precision = #tpu.contract_precision<fp32>} : vector<8x128xf32>, vector<128x128xf32>, vector<8x128xf32> -> vector<8x128xf32>
    %6 = vector.broadcast %4 : vector<1x128xf32> to vector<8x128xf32>
    %7 = arith.addf %5, %6 : vector<8x128xf32>
    %cst_7 = arith.constant 0.000000e+00 : f32
    %8 = vector.broadcast %cst_7 : f32 to vector<8x128xf32>
    %9 = arith.maximumf %7, %8 : vector<8x128xf32>
    %c1 = arith.constant 1 : index
    %c0_8 = arith.constant 0 : index
    %c0_9 = arith.constant 0 : index
    %10 = vector.load %arg2[%c1, %c0_8, %c0_9] : memref<2x128x128xf32, #tpu.memory_space<vmem>>, vector<1x128x128xf32>
    %11 = vector.shape_cast %10 : vector<1x128x128xf32> to vector<128x128xf32>
    %c1_10 = arith.constant 1 : index
    %c0_11 = arith.constant 0 : index
    %c0_12 = arith.constant 0 : index
    %12 = vector.load %arg3[%c1_10, %c0_11, %c0_12] : memref<3x1x128xf32, #tpu.memory_space<vmem>>, vector<1x1x128xf32>
    %13 = vector.shape_cast %12 : vector<1x1x128xf32> to vector<1x128xf32>
    %cst_13 = arith.constant dense<0.000000e+00> : vector<8x128xf32>
    %14 = tpu.matmul %9, %11, %cst_13 {dimension_numbers = #tpu.dot_dimension_numbers<[1], [0], [0], [1], [0, 0, 1, 1], [], []>, precision = #tpu.contract_precision<fp32>} : vector<8x128xf32>, vector<128x128xf32>, vector<8x128xf32> -> vector<8x128xf32>
    %15 = vector.broadcast %13 : vector<1x128xf32> to vector<8x128xf32>
    %16 = arith.addf %14, %15 : vector<8x128xf32>
    %cst_14 = arith.constant 0.000000e+00 : f32
    %17 = vector.broadcast %cst_14 : f32 to vector<8x128xf32>
    %18 = arith.maximumf %16, %17 : vector<8x128xf32>
    %19 = tpu.concatenate %18, %0 in 1 : vector<8x128xf32>, vector<8x128xf32> -> vector<8x256xf32>
    %c0_15 = arith.constant 0 : index
    %c0_16 = arith.constant 0 : index
    %20 = vector.load %arg4[%c0_15, %c0_16] : memref<256x128xf32, #tpu.memory_space<vmem>>, vector<256x128xf32>
    %cst_17 = arith.constant dense<0.000000e+00> : vector<8x128xf32>
    %21 = tpu.matmul %19, %20, %cst_17 {dimension_numbers = #tpu.dot_dimension_numbers<[1], [0], [0], [1], [0, 0, 1, 1], [], []>, precision = #tpu.contract_precision<fp32>} : vector<8x256xf32>, vector<256x128xf32>, vector<8x128xf32> -> vector<8x128xf32>
    %c2 = arith.constant 2 : index
    %c0_18 = arith.constant 0 : index
    %c0_19 = arith.constant 0 : index
    %22 = vector.load %arg3[%c2, %c0_18, %c0_19] : memref<3x1x128xf32, #tpu.memory_space<vmem>>, vector<1x1x128xf32>
    %23 = vector.shape_cast %22 : vector<1x1x128xf32> to vector<1x128xf32>
    %24 = vector.broadcast %23 : vector<1x128xf32> to vector<8x128xf32>
    %25 = arith.addf %21, %24 : vector<8x128xf32>
    %c0_20 = arith.constant 0 : index
    %c0_21 = arith.constant 0 : index
    %26 = vector.load %arg5[%c0_20, %c0_21] : memref<8x128xf32, #tpu.memory_space<vmem>>, vector<8x128xf32>
    tpu.vector_store %arg5[%c0_20, %c0_21], %25 {strides = array<i32>} : memref<8x128xf32, #tpu.memory_space<vmem>>, vector<8x128xf32>,
    return
  }
  func.func @transform_0(%arg0: i32) -> (i32, i32) {
    %c0_i32 = arith.constant 0 : i32
    %c0_i32_0 = arith.constant 0 : i32
    return %arg0, %c0_i32 : i32, i32
  }
  func.func @transform_1(%arg0: i32) -> (i32, i32, i32) {
    %c0_i32 = arith.constant 0 : i32
    %c0_i32_0 = arith.constant 0 : i32
    %c0_i32_1 = arith.constant 0 : i32
    %c0_i32_2 = arith.constant 0 : i32
    return %c0_i32, %c0_i32_0, %c0_i32_1 : i32, i32, i32
  }
  func.func @transform_2(%arg0: i32) -> (i32, i32, i32) {
    %c0_i32 = arith.constant 0 : i32
    %c0_i32_0 = arith.constant 0 : i32
    %c0_i32_1 = arith.constant 0 : i32
    %c0_i32_2 = arith.constant 0 : i32
    return %c0_i32, %c0_i32_0, %c0_i32_1 : i32, i32, i32
  }
  func.func @transform_3(%arg0: i32) -> (i32, i32) {
    %c0_i32 = arith.constant 0 : i32
    %c0_i32_0 = arith.constant 0 : i32
    %c0_i32_1 = arith.constant 0 : i32
    return %c0_i32, %c0_i32_0 : i32, i32
  }
  func.func @transform_4(%arg0: i32) -> (i32, i32) {
    %c0_i32 = arith.constant 0 : i32
    %c0_i32_0 = arith.constant 0 : i32
    return %arg0, %c0_i32 : i32, i32
  }
}

</mosaic_0001>

<llo_original>
// kernel: tpu_custom_call.1
$region0: #{tpu_custom_call.1}
  #allocation0 [shape = 'u32[]', space=smem, size = 0x4, offset = 0x4, fixed_abs, tag = 'smem constant byte address 0x4 - core index']
  #allocation1 [shape = 'u32[144,128]{1,0:T(1,128)}', space=vmem, size = 0x12000, scoped, tag = 'internal scratch']
  %s0 = inlined_call_operand.hbm [shape: f32[8,128], index: 0, kind: input, shape index: {}]
  %s1 = inlined_call_operand.hbm [shape: f32[2,128,128], index: 1, kind: input, shape index: {}]
  %s2 = inlined_call_operand.vmem [shape: f32[3,1,128], index: 2, kind: input, shape index: {}]
  %s3 = inlined_call_operand.hbm [shape: f32[256,128], index: 3, kind: input, shape index: {}]
  %s4 = inlined_call_operand.hbm [shape: f32[8,128], index: 4, kind: output, shape index: {}]
  %s5 = sld [smem:[#allocation0]]
  $region38: #{tpu_custom_call.1} parent=0
    _
  %s7 = ssub.s32 1, %s5
  %s8 = scalar_select 0, %s7, %s5
  $region1: #{tpu_custom_call.1} parent=0
    #allocation2 [shape = 'u8[4096]{0}', space=vmem, size = 0x1000, scoped, tag = 'input window, operand 0, single buffered']
    #allocation3 [shape = 's32[1]{0}', space=sflag, size = 0x4, scoped, tag = 'scoped memory for tpu_custom_call.1']
    #allocation4 [shape = 's32[1]{0}', space=sflag, size = 0x4, scoped, tag = 'scoped memory for tpu_custom_call.1']
    #allocation5 [shape = 'u8[131072]{0}', space=vmem, size = 0x20000, scoped, tag = 'input window, operand 1, single buffered']
    #allocation6 [shape = 's32[1]{0}', space=sflag, size = 0x4, scoped, tag = 'scoped memory for tpu_custom_call.1']
    #allocation7 [shape = 'u8[131072]{0}', space=vmem, size = 0x20000, scoped, tag = 'input window, operand 3, single buffered']
    #allocation8 [shape = 'u8[4096]{0}', space=vmem, size = 0x1000, scoped, tag = 'output window, operand 0, single buffered']
    %9 = vsyncpa [#allocation3], 0
    %10 = vsyncpa [#allocation6], 0
    %11 = vsyncpa [#allocation4], 0
    // Predicated region
    $region2: #{tpu_custom_call.1} parent=1 // pred_check
      _
    $region3: #{tpu_custom_call.1} parent=1 // pred_check_branch
      %13 = sbr.rel (0) target = $region5
    $region4: #{tpu_custom_call.1} parent=1 // pred_region
      %s15 = ssub.s32 128, 128
      %16 = vsyncadd [#allocation3], %s15
      %s18 = sshll.u32 [#allocation2], 4
      %s19 = int_to_ptr.vmem [resolvable:$true] %s18
      %21 = dma.hbm_to_vmem [thread:$0]  %s0, 128, %s19, [#allocation3]
    $region5: #{tpu_custom_call.1} parent=1 // pred_fallthru
      _
    // Predicated region
    $region6: #{tpu_custom_call.1} parent=1 // pred_check
      _
    $region7: #{tpu_custom_call.1} parent=1 // pred_check_branch
      %23 = sbr.rel (0) target = $region9
    $region8: #{tpu_custom_call.1} parent=1 // pred_region
      %s25 = ssub.s32 4096, 4096
      %26 = vsyncadd [#allocation6], %s25
      %s27 = sshll.u32 [#allocation5], 4
      %s28 = int_to_ptr.vmem [resolvable:$true] %s27
      %33 = dma.hbm_to_vmem [thread:$0]  %s1, 4096, %s28, [#allocation6], 128, 128, 8
    $region9: #{tpu_custom_call.1} parent=1 // pred_fallthru
      _
    // Predicated region
    $region10: #{tpu_custom_call.1} parent=1 // pred_check
      _
    $region11: #{tpu_custom_call.1} parent=1 // pred_check_branch
      %35 = sbr.rel (0) target = $region13
    $region12: #{tpu_custom_call.1} parent=1 // pred_region
      _
    $region13: #{tpu_custom_call.1} parent=1 // pred_fallthru
      _
    // Predicated region
    $region14: #{tpu_custom_call.1} parent=1 // pred_check
      _
    $region15: #{tpu_custom_call.1} parent=1 // pred_check_branch
      %37 = sbr.rel (0) target = $region17
    $region16: #{tpu_custom_call.1} parent=1 // pred_region
      %s39 = ssub.s32 4096, 4096
      %40 = vsyncadd [#allocation6], %s39
      %s41 = sshll.u32 [#allocation7], 4
      %s42 = int_to_ptr.vmem [resolvable:$true] %s41
      %47 = dma.hbm_to_vmem [thread:$0]  %s3, 4096, %s42, [#allocation6], 128, 128, 8
    $region17: #{tpu_custom_call.1} parent=1 // pred_fallthru
      _
    // Predicated region
    $region18: #{tpu_custom_call.1} parent=1 // pred_check
      _
    $region19: #{tpu_custom_call.1} parent=1 // pred_check_branch
      %49 = sbr.rel (0) target = $region21
    $region20: #{tpu_custom_call.1} parent=1 // pred_region
      %50 = dma.done [#allocation3], 128
    $region21: #{tpu_custom_call.1} parent=1 // pred_fallthru
      _
    // Predicated region
    $region22: #{tpu_custom_call.1} parent=1 // pred_check
      _
    $region23: #{tpu_custom_call.1} parent=1 // pred_check_branch
      %52 = sbr.rel (0) target = $region25
    $region24: #{tpu_custom_call.1} parent=1 // pred_region
      %53 = dma.done [#allocation6], 4096
    $region25: #{tpu_custom_call.1} parent=1 // pred_fallthru
      _
    // Predicated region
    $region26: #{tpu_custom_call.1} parent=1 // pred_check
      _
    $region27: #{tpu_custom_call.1} parent=1 // pred_check_branch
      %55 = sbr.rel (0) target = $region29
    $region28: #{tpu_custom_call.1} parent=1 // pred_region
      %56 = dma.done [#allocation6], 4096
    $region29: #{tpu_custom_call.1} parent=1 // pred_fallthru
      _
    %v57 = vld [vmem:[#allocation2] sm:$0xff]
    %v58 = vld [vmem:[#allocation5] sm:$0xff]
    %v59 = vld [vmem:[#allocation5 + $0x8] sm:$0xff]
    %v60 = vld [vmem:[#allocation5 + $0x10] sm:$0xff]
    %v61 = vld [vmem:[#allocation5 + $0x18] sm:$0xff]
    %v62 = vld [vmem:[#allocation5 + $0x20] sm:$0xff]
    %v63 = vld [vmem:[#allocation5 + $0x28] sm:$0xff]
    %v64 = vld [vmem:[#allocation5 + $0x30] sm:$0xff]
    %v65 = vld [vmem:[#allocation5 + $0x38] sm:$0xff]
    %v66 = vld [vmem:[#allocation5 + $0x40] sm:$0xff]
    %v67 = vld [vmem:[#allocation5 + $0x48] sm:$0xff]
    %v68 = vld [vmem:[#allocation5 + $0x50] sm:$0xff]
    %v69 = vld [vmem:[#allocation5 + $0x58] sm:$0xff]
    %v70 = vld [vmem:[#allocation5 + $0x60] sm:$0xff]
    %v71 = vld [vmem:[#allocation5 + $0x68] sm:$0xff]
    %v72 = vld [vmem:[#allocation5 + $0x70] sm:$0xff]
    %v73 = vld [vmem:[#allocation5 + $0x78] sm:$0xff]
    %v74 = vld [vmem:[%s2] sm:$0x1]
    %v76 = vlaneseq
    %v77 = vshrl.u32 %v76, 7
    %v78 = vsub.s32 0, %v77
    %v79 = vrot.slane %v74, %v78
    %81 = vmatprep.subr.mxu0 0.0
    %v82 = vand.u32 %v58, 4294901760
    %83 = vmatpush1.msra.mxu0 %v82
    %84 = vmatprep.subr.mxu0 0.0
    %v85 = vand.u32 %v59, 4294901760
    %86 = vmatpush1.msra.mxu0 %v85
    %87 = vmatprep.subr.mxu0 0.0
    %v88 = vand.u32 %v60, 4294901760
    %89 = vmatpush1.msra.mxu0 %v88
    %90 = vmatprep.subr.mxu0 0.0
    %v91 = vand.u32 %v61, 4294901760
    %92 = vmatpush1.msra.mxu0 %v91
    %93 = vmatprep.subr.mxu0 0.0
    %v94 = vand.u32 %v62, 4294901760
    %95 = vmatpush1.msra.mxu0 %v94
    %96 = vmatprep.subr.mxu0 0.0
    %v97 = vand.u32 %v63, 4294901760
    %98 = vmatpush1.msra.mxu0 %v97
    %99 = vmatprep.subr.mxu0 0.0
    %v100 = vand.u32 %v64, 4294901760
    %101 = vmatpush1.msra.mxu0 %v100
    %102 = vmatprep.subr.mxu0 0.0
    %v103 = vand.u32 %v65, 4294901760
    %104 = vmatpush1.msra.mxu0 %v103
    %105 = vmatprep.subr.mxu0 0.0
    %v106 = vand.u32 %v66, 4294901760
    %107 = vmatpush1.msra.mxu0 %v106
    %108 = vmatprep.subr.mxu0 0.0
    %v109 = vand.u32 %v67, 4294901760
    %110 = vmatpush1.msra.mxu0 %v109
    %111 = vmatprep.subr.mxu0 0.0
    %v112 = vand.u32 %v68, 4294901760
    %113 = vmatpush1.msra.mxu0 %v112
    %114 = vmatprep.subr.mxu0 0.0
    %v115 = vand.u32 %v69, 4294901760
    %116 = vmatpush1.msra.mxu0 %v115
    %117 = vmatprep.subr.mxu0 0.0
    %v118 = vand.u32 %v70, 4294901760
    %119 = vmatpush1.msra.mxu0 %v118
    %120 = vmatprep.subr.mxu0 0.0
    %v121 = vand.u32 %v71, 4294901760
    %122 = vmatpush1.msra.mxu0 %v121
    %123 = vmatprep.subr.mxu0 0.0
    %v124 = vand.u32 %v72, 4294901760
    %125 = vmatpush1.msra.mxu0 %v124
    %126 = vmatprep.subr.mxu0 0.0
    %v127 = vand.u32 %v73, 4294901760
    %128 = vmatpush1.msra.mxu0 %v127
    %129 = vmatprep.subr.mxu0 0.0
    %130 = vmatpush1.msra.mxu0 0.0
    %131 = vmatprep.subr.mxu0 0.0
    %132 = vmatpush1.msra.mxu0 0.0
    %133 = vmatprep.subr.mxu0 0.0
    %134 = vmatpush1.msra.mxu0 0.0
    %135 = vmatprep.subr.mxu0 0.0
    %136 = vmatpush1.msra.mxu0 0.0
    %137 = vmatprep.subr.mxu0 0.0
    %138 = vmatpush1.msra.mxu0 0.0
    %139 = vmatprep.subr.mxu0 0.0
    %140 = vmatpush1.msra.mxu0 0.0
    %141 = vmatprep.subr.mxu0 0.0
    %142 = vmatpush1.msra.mxu0 0.0
    %143 = vmatprep.subr.mxu0 0.0
    %144 = vmatpush1.msra.mxu0 0.0
    %145 = vmatprep.subr.mxu0 0.0
    %146 = vmatpush1.msra.mxu0 0.0
    %147 = vmatprep.subr.mxu0 0.0
    %148 = vmatpush1.msra.mxu0 0.0
    %149 = vmatprep.subr.mxu0 0.0
    %150 = vmatpush1.msra.mxu0 0.0
    %151 = vmatprep.subr.mxu0 0.0
    %152 = vmatpush1.msra.mxu0 0.0
    %153 = vmatprep.subr.mxu0 0.0
    %154 = vmatpush1.msra.mxu0 0.0
    %155 = vmatprep.subr.mxu0 0.0
    %156 = vmatpush1.msra.mxu0 0.0
    %157 = vmatprep.subr.mxu0 0.0
    %158 = vmatpush1.msra.mxu0 0.0
    %159 = vmatprep.subr.mxu0 0.0
    %160 = vmatpush1.msra.mxu0 0.0
    %161 = vmatprep.mubr.f32.mxu0 0.0
    %v162 = vand.u32 %v57, 4294901760
    %v163 = vsub.f32 %v57, %v162
    %v164 = vand.u32 %v163, 4294901760
    %v165 = vsub.f32 %v163, %v164
    %v166 = vand.u32 %v165, 4294901760
    %167 = vmatmul.mubr.f32.gmra.mrb[0].mxu0 %v166
    %v168 = vpop.f32.mrb[0].mxu0
    %v169 = vadd.f32 %v79, %v168
    %v170 = vpop.f32.mrb[0].mxu0
    %171 = vdwg.mxu0
    %172 = vmatprep.subr.mxu0 0.0
    %v173 = vand.u32 %v58, 4294901760
    %v174 = vsub.f32 %v58, %v173
    %v175 = vand.u32 %v174, 4294901760
    %v176 = vsub.f32 %v174, %v175
    %v177 = vand.u32 %v176, 4294901760
    %178 = vmatpush1.msra.mxu0 %v177
    %179 = vmatprep.subr.mxu0 0.0
    %v180 = vand.u32 %v59, 4294901760
    %v181 = vsub.f32 %v59, %v180
    %v182 = vand.u32 %v181, 4294901760
    %v183 = vsub.f32 %v181, %v182
    %v184 = vand.u32 %v183, 4294901760
    %185 = vmatpush1.msra.mxu0 %v184
    %186 = vmatprep.subr.mxu0 0.0
    %v187 = vand.u32 %v60, 4294901760
    %v188 = vsub.f32 %v60, %v187
    %v189 = vand.u32 %v188, 4294901760
    %v190 = vsub.f32 %v188, %v189
    %v191 = vand.u32 %v190, 4294901760
    %192 = vmatpush1.msra.mxu0 %v191
    %193 = vmatprep.subr.mxu0 0.0
    %v194 = vand.u32 %v61, 4294901760
    %v195 = vsub.f32 %v61, %v194
    %v196 = vand.u32 %v195, 4294901760
    %v197 = vsub.f32 %v195, %v196
    %v198 = vand.u32 %v197, 4294901760
    %199 = vmatpush1.msra.mxu0 %v198
    %200 = vmatprep.subr.mxu0 0.0
    %v201 = vand.u32 %v62, 4294901760
    %v202 = vsub.f32 %v62, %v201
    %v203 = vand.u32 %v202, 4294901760
    %v204 = vsub.f32 %v202, %v203
    %v205 = vand.u32 %v204, 4294901760
    %206 = vmatpush1.msra.mxu0 %v205
    %207 = vmatprep.subr.mxu0 0.0
    %v208 = vand.u32 %v63, 4294901760
    %v209 = vsub.f32 %v63, %v208
    %v210 = vand.u32 %v209, 4294901760
    %v211 = vsub.f32 %v209, %v210
    %v212 = vand.u32 %v211, 4294901760
    %213 = vmatpush1.msra.mxu0 %v212
    %214 = vmatprep.subr.mxu0 0.0
    %v215 = vand.u32 %v64, 4294901760
    %v216 = vsub.f32 %v64, %v215
    %v217 = vand.u32 %v216, 4294901760
    %v218 = vsub.f32 %v216, %v217
    %v219 = vand.u32 %v218, 4294901760
    %220 = vmatpush1.msra.mxu0 %v219
    %221 = vmatprep.subr.mxu0 0.0
    %v222 = vand.u32 %v65, 4294901760
    %v223 = vsub.f32 %v65, %v222
    %v224 = vand.u32 %v223, 4294901760
    %v225 = vsub.f32 %v223, %v224
    %v226 = vand.u32 %v225, 4294901760
    %227 = vmatpush1.msra.mxu0 %v226
    %228 = vmatprep.subr.mxu0 0.0
    %v229 = vand.u32 %v66, 4294901760
    %v230 = vsub.f32 %v66, %v229
    %v231 = vand.u32 %v230, 4294901760
    %v232 = vsub.f32 %v230, %v231
    %v233 = vand.u32 %v232, 4294901760
    %234 = vmatpush1.msra.mxu0 %v233
    %235 = vmatprep.subr.mxu0 0.0
    %v236 = vand.u32 %v67, 4294901760
    %v237 = vsub.f32 %v67, %v236
    %v238 = vand.u32 %v237, 4294901760
    %v239 = vsub.f32 %v237, %v238
    %v240 = vand.u32 %v239, 4294901760
    %241 = vmatpush1.msra.mxu0 %v240
    %242 = vmatprep.subr.mxu0 0.0
    %v243 = vand.u32 %v68, 4294901760
    %v244 = vsub.f32 %v68, %v243
    %v245 = vand.u32 %v244, 4294901760
    %v246 = vsub.f32 %v244, %v245
    %v247 = vand.u32 %v246, 4294901760
    %248 = vmatpush1.msra.mxu0 %v247
    %249 = vmatprep.subr.mxu0 0.0
    %v250 = vand.u32 %v69, 4294901760
    %v251 = vsub.f32 %v69, %v250
    %v252 = vand.u32 %v251, 4294901760
    %v253 = vsub.f32 %v251, %v252
    %v254 = vand.u32 %v253, 4294901760
    %255 = vmatpush1.msra.mxu0 %v254
    %256 = vmatprep.subr.mxu0 0.0
    %v257 = vand.u32 %v70, 4294901760
    %v258 = vsub.f32 %v70, %v257
    %v259 = vand.u32 %v258, 4294901760
    %v260 = vsub.f32 %v258, %v259
    %v261 = vand.u32 %v260, 4294901760
    %262 = vmatpush1.msra.mxu0 %v261
    %263 = vmatprep.subr.mxu0 0.0
    %v264 = vand.u32 %v71, 4294901760
    %v265 = vsub.f32 %v71, %v264
    %v266 = vand.u32 %v265, 4294901760
    %v267 = vsub.f32 %v265, %v266
    %v268 = vand.u32 %v267, 4294901760
    %269 = vmatpush1.msra.mxu0 %v268
    %270 = vmatprep.subr.mxu0 0.0
    %v271 = vand.u32 %v72, 4294901760
    %v272 = vsub.f32 %v72, %v271
    %v273 = vand.u32 %v272, 4294901760
    %v274 = vsub.f32 %v272, %v273
    %v275 = vand.u32 %v274, 4294901760
    %276 = vmatpush1.msra.mxu0 %v275
    %277 = vmatprep.subr.mxu0 0.0
    %v278 = vand.u32 %v73, 4294901760
    %v279 = vsub.f32 %v73, %v278
    %v280 = vand.u32 %v279, 4294901760
    %v281 = vsub.f32 %v279, %v280
    %v282 = vand.u32 %v281, 4294901760
    %283 = vmatpush1.msra.mxu0 %v282
    %284 = vmatprep.subr.mxu0 0.0
    %285 = vmatpush1.msra.mxu0 0.0
    %286 = vmatprep.subr.mxu0 0.0
    %287 = vmatpush1.msra.mxu0 0.0
    %288 = vmatprep.subr.mxu0 0.0
    %289 = vmatpush1.msra.mxu0 0.0
    %290 = vmatprep.subr.mxu0 0.0
    %291 = vmatpush1.msra.mxu0 0.0
    %292 = vmatprep.subr.mxu0 0.0
    %293 = vmatpush1.msra.mxu0 0.0
    %294 = vmatprep.subr.mxu0 0.0
    %295 = vmatpush1.msra.mxu0 0.0
    %296 = vmatprep.subr.mxu0 0.0
    %297 = vmatpush1.msra.mxu0 0.0
    %298 = vmatprep.subr.mxu0 0.0
    %299 = vmatpush1.msra.mxu0 0.0
    %300 = vmatprep.subr.mxu0 0.0
    %301 = vmatpush1.msra.mxu0 0.0
    %302 = vmatprep.subr.mxu0 0.0
    %303 = vmatpush1.msra.mxu0 0.0
    %304 = vmatprep.subr.mxu0 0.0
    %305 = vmatpush1.msra.mxu0 0.0
    %306 = vmatprep.subr.mxu0 0.0
    %307 = vmatpush1.msra.mxu0 0.0
    %308 = vmatprep.subr.mxu0 0.0
    %309 = vmatpush1.msra.mxu0 0.0
    %310 = vmatprep.subr.mxu0 0.0
    %311 = vmatpush1.msra.mxu0 0.0
    %312 = vmatprep.subr.mxu0 0.0
    %313 = vmatpush1.msra.mxu0 0.0
    %314 = vmatprep.subr.mxu0 0.0
    %315 = vmatpush1.msra.mxu0 0.0
    %316 = vmatprep.mubr.f32.mxu0 0.0
    %v317 = vand.u32 %v57, 4294901760
    %318 = vmatmul.mubr.f32.gmra.mrb[0].mxu0 %v317
    %v319 = vpop.f32.mrb[0].mxu0
    %v320 = vadd.f32 %v169, %v319
    %v321 = vpop.f32.mrb[0].mxu0
    %322 = vdwg.mxu0
    %323 = vmatprep.subr.mxu0 0.0
    %v324 = vand.u32 %v58, 4294901760
    %v325 = vsub.f32 %v58, %v324
    %326 = vmatpush1.msra.mxu0 %v325
    %327 = vmatprep.subr.mxu0 0.0
    %v328 = vand.u32 %v59, 4294901760
    %v329 = vsub.f32 %v59, %v328
    %330 = vmatpush1.msra.mxu0 %v329
    %331 = vmatprep.subr.mxu0 0.0
    %v332 = vand.u32 %v60, 4294901760
    %v333 = vsub.f32 %v60, %v332
    %334 = vmatpush1.msra.mxu0 %v333
    %335 = vmatprep.subr.mxu0 0.0
    %v336 = vand.u32 %v61, 4294901760
    %v337 = vsub.f32 %v61, %v336
    %338 = vmatpush1.msra.mxu0 %v337
    %339 = vmatprep.subr.mxu0 0.0
    %v340 = vand.u32 %v62, 4294901760
    %v341 = vsub.f32 %v62, %v340
    %342 = vmatpush1.msra.mxu0 %v341
    %343 = vmatprep.subr.mxu0 0.0
    %v344 = vand.u32 %v63, 4294901760
    %v345 = vsub.f32 %v63, %v344
    %346 = vmatpush1.msra.mxu0 %v345
    %347 = vmatprep.subr.mxu0 0.0
    %v348 = vand.u32 %v64, 4294901760
    %v349 = vsub.f32 %v64, %v348
    %350 = vmatpush1.msra.mxu0 %v349
    %351 = vmatprep.subr.mxu0 0.0
    %v352 = vand.u32 %v65, 4294901760
    %v353 = vsub.f32 %v65, %v352
    %354 = vmatpush1.msra.mxu0 %v353
    %355 = vmatprep.subr.mxu0 0.0
    %v356 = vand.u32 %v66, 4294901760
    %v357 = vsub.f32 %v66, %v356
    %358 = vmatpush1.msra.mxu0 %v357
    %359 = vmatprep.subr.mxu0 0.0
    %v360 = vand.u32 %v67, 4294901760
    %v361 = vsub.f32 %v67, %v360
    %362 = vmatpush1.msra.mxu0 %v361
    %363 = vmatprep.subr.mxu0 0.0
    %v364 = vand.u32 %v68, 4294901760
    %v365 = vsub.f32 %v68, %v364
    %366 = vmatpush1.msra.mxu0 %v365
    %367 = vmatprep.subr.mxu0 0.0
    %v368 = vand.u32 %v69, 4294901760
    %v369 = vsub.f32 %v69, %v368
    %370 = vmatpush1.msra.mxu0 %v369
    %371 = vmatprep.subr.mxu0 0.0
    %v372 = vand.u32 %v70, 4294901760
    %v373 = vsub.f32 %v70, %v372
    %374 = vmatpush1.msra.mxu0 %v373
    %375 = vmatprep.subr.mxu0 0.0
    %v376 = vand.u32 %v71, 4294901760
    %v377 = vsub.f32 %v71, %v376
    %378 = vmatpush1.msra.mxu0 %v377
    %379 = vmatprep.subr.mxu0 0.0
    %v380 = vand.u32 %v72, 4294901760
    %v381 = vsub.f32 %v72, %v380
    %382 = vmatpush1.msra.mxu0 %v381
    %383 = vmatprep.subr.mxu0 0.0
    %v384 = vand.u32 %v73, 4294901760
    %v385 = vsub.f32 %v73, %v384
    %386 = vmatpush1.msra.mxu0 %v385
    %387 = vmatprep.subr.mxu0 0.0
    %388 = vmatpush1.msra.mxu0 0.0
    %389 = vmatprep.subr.mxu0 0.0
    %390 = vmatpush1.msra.mxu0 0.0
    %391 = vmatprep.subr.mxu0 0.0
    %392 = vmatpush1.msra.mxu0 0.0
    %393 = vmatprep.subr.mxu0 0.0
    %394 = vmatpush1.msra.mxu0 0.0
    %395 = vmatprep.subr.mxu0 0.0
    %396 = vmatpush1.msra.mxu0 0.0
    %397 = vmatprep.subr.mxu0 0.0
    %398 = vmatpush1.msra.mxu0 0.0
    %399 = vmatprep.subr.mxu0 0.0
    %400 = vmatpush1.msra.mxu0 0.0
    %401 = vmatprep.subr.mxu0 0.0
    %402 = vmatpush1.msra.mxu0 0.0
    %403 = vmatprep.subr.mxu0 0.0
    %404 = vmatpush1.msra.mxu0 0.0
    %405 = vmatprep.subr.mxu0 0.0
    %406 = vmatpush1.msra.mxu0 0.0
    %407 = vmatprep.subr.mxu0 0.0
    %408 = vmatpush1.msra.mxu0 0.0
    %409 = vmatprep.subr.mxu0 0.0
    %410 = vmatpush1.msra.mxu0 0.0
    %411 = vmatprep.subr.mxu0 0.0
    %412 = vmatpush1.msra.mxu0 0.0
    %413 = vmatprep.subr.mxu0 0.0
    %414 = vmatpush1.msra.mxu0 0.0
    %415 = vmatprep.subr.mxu0 0.0
    %416 = vmatpush1.msra.mxu0 0.0
    %417 = vmatprep.subr.mxu0 0.0
    %418 = vmatpush1.msra.mxu0 0.0
    %419 = vmatprep.mubr.f32.mxu0 0.0
    %v420 = vand.u32 %v57, 4294901760
    %v421 = vsub.f32 %v57, %v420
    %422 = vmatmul.mubr.f32.gmra.mrb[0].mxu0 %v421
    %v423 = vpop.f32.mrb[0].mxu0
    %v424 = vadd.f32 %v320, %v423
    %v425 = vpop.f32.mrb[0].mxu0
    %426 = vdwg.mxu0
    %427 = vmatprep.subr.mxu0 0.0
    %v428 = vand.u32 %v58, 4294901760
    %429 = vmatpush1.msra.mxu0 %v428
    %430 = vmatprep.subr.mxu0 0.0
    %v431 = vand.u32 %v59, 4294901760
    %432 = vmatpush1.msra.mxu0 %v431
    %433 = vmatprep.subr.mxu0 0.0
    %v434 = vand.u32 %v60, 4294901760
    %435 = vmatpush1.msra.mxu0 %v434
    %436 = vmatprep.subr.mxu0 0.0
    %v437 = vand.u32 %v61, 4294901760
    %438 = vmatpush1.msra.mxu0 %v437
    %439 = vmatprep.subr.mxu0 0.0
    %v440 = vand.u32 %v62, 4294901760
    %441 = vmatpush1.msra.mxu0 %v440
    %442 = vmatprep.subr.mxu0 0.0
    %v443 = vand.u32 %v63, 4294901760
    %444 = vmatpush1.msra.mxu0 %v443
    %445 = vmatprep.subr.mxu0 0.0
    %v446 = vand.u32 %v64, 4294901760
    %447 = vmatpush1.msra.mxu0 %v446
    %448 = vmatprep.subr.mxu0 0.0
    %v449 = vand.u32 %v65, 4294901760
    %450 = vmatpush1.msra.mxu0 %v449
    %451 = vmatprep.subr.mxu0 0.0
    %v452 = vand.u32 %v66, 4294901760
    %453 = vmatpush1.msra.mxu0 %v452
    %454 = vmatprep.subr.mxu0 0.0
    %v455 = vand.u32 %v67, 4294901760
    %456 = vmatpush1.msra.mxu0 %v455
    %457 = vmatprep.subr.mxu0 0.0
    %v458 = vand.u32 %v68, 4294901760
    %459 = vmatpush1.msra.mxu0 %v458
    %460 = vmatprep.subr.mxu0 0.0
    %v461 = vand.u32 %v69, 4294901760
    %462 = vmatpush1.msra.mxu0 %v461
    %463 = vmatprep.subr.mxu0 0.0
    %v464 = vand.u32 %v70, 4294901760
    %465 = vmatpush1.msra.mxu0 %v464
    %466 = vmatprep.subr.mxu0 0.0
    %v467 = vand.u32 %v71, 4294901760
    %468 = vmatpush1.msra.mxu0 %v467
    %469 = vmatprep.subr.mxu0 0.0
    %v470 = vand.u32 %v72, 4294901760
    %471 = vmatpush1.msra.mxu0 %v470
    %472 = vmatprep.subr.mxu0 0.0
    %v473 = vand.u32 %v73, 4294901760
    %474 = vmatpush1.msra.mxu0 %v473
    %475 = vmatprep.subr.mxu0 0.0
    %476 = vmatpush1.msra.mxu0 0.0
    %477 = vmatprep.subr.mxu0 0.0
    %478 = vmatpush1.msra.mxu0 0.0
    %479 = vmatprep.subr.mxu0 0.0
    %480 = vmatpush1.msra.mxu0 0.0
    %481 = vmatprep.subr.mxu0 0.0
    %482 = vmatpush1.msra.mxu0 0.0
    %483 = vmatprep.subr.mxu0 0.0
    %484 = vmatpush1.msra.mxu0 0.0
    %485 = vmatprep.subr.mxu0 0.0
    %486 = vmatpush1.msra.mxu0 0.0
    %487 = vmatprep.subr.mxu0 0.0
    %488 = vmatpush1.msra.mxu0 0.0
    %489 = vmatprep.subr.mxu0 0.0
    %490 = vmatpush1.msra.mxu0 0.0
    %491 = vmatprep.subr.mxu0 0.0
    %492 = vmatpush1.msra.mxu0 0.0
    %493 = vmatprep.subr.mxu0 0.0
    %494 = vmatpush1.msra.mxu0 0.0
    %495 = vmatprep.subr.mxu0 0.0
    %496 = vmatpush1.msra.mxu0 0.0
    %497 = vmatprep.subr.mxu0 0.0
    %498 = vmatpush1.msra.mxu0 0.0
    %499 = vmatprep.subr.mxu0 0.0
    %500 = vmatpush1.msra.mxu0 0.0
    %501 = vmatprep.subr.mxu0 0.0
    %502 = vmatpush1.msra.mxu0 0.0
    %503 = vmatprep.subr.mxu0 0.0
    %504 = vmatpush1.msra.mxu0 0.0
    %505 = vmatprep.subr.mxu0 0.0
    %506 = vmatpush1.msra.mxu0 0.0
    %507 = vmatprep.mubr.f32.mxu0 0.0
    %v508 = vand.u32 %v57, 4294901760
    %v509 = vsub.f32 %v57, %v508
    %v510 = vand.u32 %v509, 4294901760
    %511 = vmatmul.mubr.f32.gmra.mrb[0].mxu0 %v510
    %v512 = vpop.f32.mrb[0].mxu0
    %v513 = vadd.f32 %v424, %v512
    %v514 = vpop.f32.mrb[0].mxu0
    %515 = vdwg.mxu0
    %516 = vmatprep.subr.mxu0 0.0
    %v517 = vand.u32 %v58, 4294901760
    %v518 = vsub.f32 %v58, %v517
    %v519 = vand.u32 %v518, 4294901760
    %520 = vmatpush1.msra.mxu0 %v519
    %521 = vmatprep.subr.mxu0 0.0
    %v522 = vand.u32 %v59, 4294901760
    %v523 = vsub.f32 %v59, %v522
    %v524 = vand.u32 %v523, 4294901760
    %525 = vmatpush1.msra.mxu0 %v524
    %526 = vmatprep.subr.mxu0 0.0
    %v527 = vand.u32 %v60, 4294901760
    %v528 = vsub.f32 %v60, %v527
    %v529 = vand.u32 %v528, 4294901760
    %530 = vmatpush1.msra.mxu0 %v529
    %531 = vmatprep.subr.mxu0 0.0
    %v532 = vand.u32 %v61, 4294901760
    %v533 = vsub.f32 %v61, %v532
    %v534 = vand.u32 %v533, 4294901760
    %535 = vmatpush1.msra.mxu0 %v534
    %536 = vmatprep.subr.mxu0 0.0
    %v537 = vand.u32 %v62, 4294901760
    %v538 = vsub.f32 %v62, %v537
    %v539 = vand.u32 %v538, 4294901760
    %540 = vmatpush1.msra.mxu0 %v539
    %541 = vmatprep.subr.mxu0 0.0
    %v542 = vand.u32 %v63, 4294901760
    %v543 = vsub.f32 %v63, %v542
    %v544 = vand.u32 %v543, 4294901760
    %545 = vmatpush1.msra.mxu0 %v544
    %546 = vmatprep.subr.mxu0 0.0
    %v547 = vand.u32 %v64, 4294901760
    %v548 = vsub.f32 %v64, %v547
    %v549 = vand.u32 %v548, 4294901760
    %550 = vmatpush1.msra.mxu0 %v549
    %551 = vmatprep.subr.mxu0 0.0
    %v552 = vand.u32 %v65, 4294901760
    %v553 = vsub.f32 %v65, %v552
    %v554 = vand.u32 %v553, 4294901760
    %555 = vmatpush1.msra.mxu0 %v554
    %556 = vmatprep.subr.mxu0 0.0
    %v557 = vand.u32 %v66, 4294901760
    %v558 = vsub.f32 %v66, %v557
    %v559 = vand.u32 %v558, 4294901760
    %560 = vmatpush1.msra.mxu0 %v559
    %561 = vmatprep.subr.mxu0 0.0
    %v562 = vand.u32 %v67, 4294901760
    %v563 = vsub.f32 %v67, %v562
    %v564 = vand.u32 %v563, 4294901760
    %565 = vmatpush1.msra.mxu0 %v564
    %566 = vmatprep.subr.mxu0 0.0
    %v567 = vand.u32 %v68, 4294901760
    %v568 = vsub.f32 %v68, %v567
    %v569 = vand.u32 %v568, 4294901760
    %570 = vmatpush1.msra.mxu0 %v569
    %571 = vmatprep.subr.mxu0 0.0
    %v572 = vand.u32 %v69, 4294901760
    %v573 = vsub.f32 %v69, %v572
    %v574 = vand.u32 %v573, 4294901760
    %575 = vmatpush1.msra.mxu0 %v574
    %576 = vmatprep.subr.mxu0 0.0
    %v577 = vand.u32 %v70, 4294901760
    %v578 = vsub.f32 %v70, %v577
    %v579 = vand.u32 %v578, 4294901760
    %580 = vmatpush1.msra.mxu0 %v579
    %581 = vmatprep.subr.mxu0 0.0
    %v582 = vand.u32 %v71, 4294901760
    %v583 = vsub.f32 %v71, %v582
    %v584 = vand.u32 %v583, 4294901760
    %585 = vmatpush1.msra.mxu0 %v584
    %586 = vmatprep.subr.mxu0 0.0
    %v587 = vand.u32 %v72, 4294901760
    %v588 = vsub.f32 %v72, %v587
    %v589 = vand.u32 %v588, 4294901760
    %590 = vmatpush1.msra.mxu0 %v589
    %591 = vmatprep.subr.mxu0 0.0
    %v592 = vand.u32 %v73, 4294901760
    %v593 = vsub.f32 %v73, %v592
    %v594 = vand.u32 %v593, 4294901760
    %595 = vmatpush1.msra.mxu0 %v594
    %596 = vmatprep.subr.mxu0 0.0
    %597 = vmatpush1.msra.mxu0 0.0
    %598 = vmatprep.subr.mxu0 0.0
    %599 = vmatpush1.msra.mxu0 0.0
    %600 = vmatprep.subr.mxu0 0.0
    %601 = vmatpush1.msra.mxu0 0.0
    %602 = vmatprep.subr.mxu0 0.0
    %603 = vmatpush1.msra.mxu0 0.0
    %604 = vmatprep.subr.mxu0 0.0
    %605 = vmatpush1.msra.mxu0 0.0
    %606 = vmatprep.subr.mxu0 0.0
    %607 = vmatpush1.msra.mxu0 0.0
    %608 = vmatprep.subr.mxu0 0.0
    %609 = vmatpush1.msra.mxu0 0.0
    %610 = vmatprep.subr.mxu0 0.0
    %611 = vmatpush1.msra.mxu0 0.0
    %612 = vmatprep.subr.mxu0 0.0
    %613 = vmatpush1.msra.mxu0 0.0
    %614 = vmatprep.subr.mxu0 0.0
    %615 = vmatpush1.msra.mxu0 0.0
    %616 = vmatprep.subr.mxu0 0.0
    %617 = vmatpush1.msra.mxu0 0.0
    %618 = vmatprep.subr.mxu0 0.0
    %619 = vmatpush1.msra.mxu0 0.0
    %620 = vmatprep.subr.mxu0 0.0
    %621 = vmatpush1.msra.mxu0 0.0
    %622 = vmatprep.subr.mxu0 0.0
    %623 = vmatpush1.msra.mxu0 0.0
    %624 = vmatprep.subr.mxu0 0.0
    %625 = vmatpush1.msra.mxu0 0.0
    %626 = vmatprep.subr.mxu0 0.0
    %627 = vmatpush1.msra.mxu0 0.0
    %628 = vmatprep.mubr.f32.mxu0 0.0
    %v629 = vand.u32 %v57, 4294901760
    %630 = vmatmul.mubr.f32.gmra.mrb[0].mxu0 %v629
    %v631 = vpop.f32.mrb[0].mxu0
    %v632 = vadd.f32 %v513, %v631
    %v633 = vpop.f32.mrb[0].mxu0
    %634 = vdwg.mxu0
    %635 = vmatprep.subr.mxu0 0.0
    %v636 = vand.u32 %v58, 4294901760
    %637 = vmatpush1.msra.mxu0 %v636
    %638 = vmatprep.subr.mxu0 0.0
    %v639 = vand.u32 %v59, 4294901760
    %640 = vmatpush1.msra.mxu0 %v639
    %641 = vmatprep.subr.mxu0 0.0
    %v642 = vand.u32 %v60, 4294901760
    %643 = vmatpush1.msra.mxu0 %v642
    %644 = vmatprep.subr.mxu0 0.0
    %v645 = vand.u32 %v61, 4294901760
    %646 = vmatpush1.msra.mxu0 %v645
    %647 = vmatprep.subr.mxu0 0.0
    %v648 = vand.u32 %v62, 4294901760
    %649 = vmatpush1.msra.mxu0 %v648
    %650 = vmatprep.subr.mxu0 0.0
    %v651 = vand.u32 %v63, 4294901760
    %652 = vmatpush1.msra.mxu0 %v651
    %653 = vmatprep.subr.mxu0 0.0
    %v654 = vand.u32 %v64, 4294901760
    %655 = vmatpush1.msra.mxu0 %v654
    %656 = vmatprep.subr.mxu0 0.0
    %v657 = vand.u32 %v65, 4294901760
    %658 = vmatpush1.msra.mxu0 %v657
    %659 = vmatprep.subr.mxu0 0.0
    %v660 = vand.u32 %v66, 4294901760
    %661 = vmatpush1.msra.mxu0 %v660
    %662 = vmatprep.subr.mxu0 0.0
    %v663 = vand.u32 %v67, 4294901760
    %664 = vmatpush1.msra.mxu0 %v663
    %665 = vmatprep.subr.mxu0 0.0
    %v666 = vand.u32 %v68, 4294901760
    %667 = vmatpush1.msra.mxu0 %v666
    %668 = vmatprep.subr.mxu0 0.0
    %v669 = vand.u32 %v69, 4294901760
    %670 = vmatpush1.msra.mxu0 %v669
    %671 = vmatprep.subr.mxu0 0.0
    %v672 = vand.u32 %v70, 4294901760
    %673 = vmatpush1.msra.mxu0 %v672
    %674 = vmatprep.subr.mxu0 0.0
    %v675 = vand.u32 %v71, 4294901760
    %676 = vmatpush1.msra.mxu0 %v675
    %677 = vmatprep.subr.mxu0 0.0
    %v678 = vand.u32 %v72, 4294901760
    %679 = vmatpush1.msra.mxu0 %v678
    %680 = vmatprep.subr.mxu0 0.0
    %v681 = vand.u32 %v73, 4294901760
    %682 = vmatpush1.msra.mxu0 %v681
    %683 = vmatprep.subr.mxu0 0.0
    %684 = vmatpush1.msra.mxu0 0.0
    %685 = vmatprep.subr.mxu0 0.0
    %686 = vmatpush1.msra.mxu0 0.0
    %687 = vmatprep.subr.mxu0 0.0
    %688 = vmatpush1.msra.mxu0 0.0
    %689 = vmatprep.subr.mxu0 0.0
    %690 = vmatpush1.msra.mxu0 0.0
    %691 = vmatprep.subr.mxu0 0.0
    %692 = vmatpush1.msra.mxu0 0.0
    %693 = vmatprep.subr.mxu0 0.0
    %694 = vmatpush1.msra.mxu0 0.0
    %695 = vmatprep.subr.mxu0 0.0
    %696 = vmatpush1.msra.mxu0 0.0
    %697 = vmatprep.subr.mxu0 0.0
    %698 = vmatpush1.msra.mxu0 0.0
    %699 = vmatprep.subr.mxu0 0.0
    %700 = vmatpush1.msra.mxu0 0.0
    %701 = vmatprep.subr.mxu0 0.0
    %702 = vmatpush1.msra.mxu0 0.0
    %703 = vmatprep.subr.mxu0 0.0
    %704 = vmatpush1.msra.mxu0 0.0
    %705 = vmatprep.subr.mxu0 0.0
    %706 = vmatpush1.msra.mxu0 0.0
    %707 = vmatprep.subr.mxu0 0.0
    %708 = vmatpush1.msra.mxu0 0.0
    %709 = vmatprep.subr.mxu0 0.0
    %710 = vmatpush1.msra.mxu0 0.0
    %711 = vmatprep.subr.mxu0 0.0
    %712 = vmatpush1.msra.mxu0 0.0
    %713 = vmatprep.subr.mxu0 0.0
    %714 = vmatpush1.msra.mxu0 0.0
    %715 = vmatprep.mubr.f32.mxu0 0.0
    %v716 = vand.u32 %v57, 4294901760
    %717 = vmatmul.mubr.f32.gmra.mrb[0].mxu0 %v716
    %v718 = vpop.f32.mrb[0].mxu0
    %v719 = vadd.f32 %v632, %v718
    %v720 = vpop.f32.mrb[0].mxu0
    %721 = vdwg.mxu0
    %v722 = vmax.f32 %v719, 0.0
    %s723 = scalar_lea.vmem [#allocation5], 128
    %v724 = vld [vmem:[%s723] sm:$0xff]
    %v725 = vld [vmem:[%s723 + $0x8] sm:$0xff]
    %v726 = vld [vmem:[%s723 + $0x10] sm:$0xff]
    %v727 = vld [vmem:[%s723 + $0x18] sm:$0xff]
    %v728 = vld [vmem:[%s723 + $0x20] sm:$0xff]
    %v729 = vld [vmem:[%s723 + $0x28] sm:$0xff]
    %v730 = vld [vmem:[%s723 + $0x30] sm:$0xff]
    %v731 = vld [vmem:[%s723 + $0x38] sm:$0xff]
    %v732 = vld [vmem:[%s723 + $0x40] sm:$0xff]
    %v733 = vld [vmem:[%s723 + $0x48] sm:$0xff]
    %v734 = vld [vmem:[%s723 + $0x50] sm:$0xff]
    %v735 = vld [vmem:[%s723 + $0x58] sm:$0xff]
    %v736 = vld [vmem:[%s723 + $0x60] sm:$0xff]
    %v737 = vld [vmem:[%s723 + $0x68] sm:$0xff]
    %v738 = vld [vmem:[%s723 + $0x70] sm:$0xff]
    %v739 = vld [vmem:[%s723 + $0x78] sm:$0xff]
    %s740 = scalar_lea.vmem %s2, 1
    %v741 = vld [vmem:[%s740] sm:$0x1]
    %v743 = vlaneseq
    %v744 = vshrl.u32 %v743, 7
    %v745 = vsub.s32 0, %v744
    %v746 = vrot.slane %v741, %v745
    %748 = vmatprep.subr.mxu0 0.0
    %v749 = vand.u32 %v724, 4294901760
    %750 = vmatpush1.msra.mxu0 %v749
    %751 = vmatprep.subr.mxu0 0.0
    %v752 = vand.u32 %v725, 4294901760
    %753 = vmatpush1.msra.mxu0 %v752
    %754 = vmatprep.subr.mxu0 0.0
    %v755 = vand.u32 %v726, 4294901760
    %756 = vmatpush1.msra.mxu0 %v755
    %757 = vmatprep.subr.mxu0 0.0
    %v758 = vand.u32 %v727, 4294901760
    %759 = vmatpush1.msra.mxu0 %v758
    %760 = vmatprep.subr.mxu0 0.0
    %v761 = vand.u32 %v728, 4294901760
    %762 = vmatpush1.msra.mxu0 %v761
    %763 = vmatprep.subr.mxu0 0.0
    %v764 = vand.u32 %v729, 4294901760
    %765 = vmatpush1.msra.mxu0 %v764
    %766 = vmatprep.subr.mxu0 0.0
    %v767 = vand.u32 %v730, 4294901760
    %768 = vmatpush1.msra.mxu0 %v767
    %769 = vmatprep.subr.mxu0 0.0
    %v770 = vand.u32 %v731, 4294901760
    %771 = vmatpush1.msra.mxu0 %v770
    %772 = vmatprep.subr.mxu0 0.0
    %v773 = vand.u32 %v732, 4294901760
    %774 = vmatpush1.msra.mxu0 %v773
    %775 = vmatprep.subr.mxu0 0.0
    %v776 = vand.u32 %v733, 4294901760
    %777 = vmatpush1.msra.mxu0 %v776
    %778 = vmatprep.subr.mxu0 0.0
    %v779 = vand.u32 %v734, 4294901760
    %780 = vmatpush1.msra.mxu0 %v779
    %781 = vmatprep.subr.mxu0 0.0
    %v782 = vand.u32 %v735, 4294901760
    %783 = vmatpush1.msra.mxu0 %v782
    %784 = vmatprep.subr.mxu0 0.0
    %v785 = vand.u32 %v736, 4294901760
    %786 = vmatpush1.msra.mxu0 %v785
    %787 = vmatprep.subr.mxu0 0.0
    %v788 = vand.u32 %v737, 4294901760
    %789 = vmatpush1.msra.mxu0 %v788
    %790 = vmatprep.subr.mxu0 0.0
    %v791 = vand.u32 %v738, 4294901760
    %792 = vmatpush1.msra.mxu0 %v791
    %793 = vmatprep.subr.mxu0 0.0
    %v794 = vand.u32 %v739, 4294901760
    %795 = vmatpush1.msra.mxu0 %v794
    %796 = vmatprep.subr.mxu0 0.0
    %797 = vmatpush1.msra.mxu0 0.0
    %798 = vmatprep.subr.mxu0 0.0
    %799 = vmatpush1.msra.mxu0 0.0
    %800 = vmatprep.subr.mxu0 0.0
    %801 = vmatpush1.msra.mxu0 0.0
    %802 = vmatprep.subr.mxu0 0.0
    %803 = vmatpush1.msra.mxu0 0.0
    %804 = vmatprep.subr.mxu0 0.0
    %805 = vmatpush1.msra.mxu0 0.0
    %806 = vmatprep.subr.mxu0 0.0
    %807 = vmatpush1.msra.mxu0 0.0
    %808 = vmatprep.subr.mxu0 0.0
    %809 = vmatpush1.msra.mxu0 0.0
    %810 = vmatprep.subr.mxu0 0.0
    %811 = vmatpush1.msra.mxu0 0.0
    %812 = vmatprep.subr.mxu0 0.0
    %813 = vmatpush1.msra.mxu0 0.0
    %814 = vmatprep.subr.mxu0 0.0
    %815 = vmatpush1.msra.mxu0 0.0
    %816 = vmatprep.subr.mxu0 0.0
    %817 = vmatpush1.msra.mxu0 0.0
    %818 = vmatprep.subr.mxu0 0.0
    %819 = vmatpush1.msra.mxu0 0.0
    %820 = vmatprep.subr.mxu0 0.0
    %821 = vmatpush1.msra.mxu0 0.0
    %822 = vmatprep.subr.mxu0 0.0
    %823 = vmatpush1.msra.mxu0 0.0
    %824 = vmatprep.subr.mxu0 0.0
    %825 = vmatpush1.msra.mxu0 0.0
    %826 = vmatprep.subr.mxu0 0.0
    %827 = vmatpush1.msra.mxu0 0.0
    %828 = vmatprep.mubr.f32.mxu0 0.0
    %v829 = vand.u32 %v722, 4294901760
    %v830 = vsub.f32 %v722, %v829
    %v831 = vand.u32 %v830, 4294901760
    %v832 = vsub.f32 %v830, %v831
    %v833 = vand.u32 %v832, 4294901760
    %834 = vmatmul.mubr.f32.gmra.mrb[0].mxu0 %v833
    %v835 = vpop.f32.mrb[0].mxu0
    %v836 = vadd.f32 %v746, %v835
    %v837 = vpop.f32.mrb[0].mxu0
    %838 = vdwg.mxu0
    %839 = vmatprep.subr.mxu0 0.0
    %v840 = vand.u32 %v724, 4294901760
    %v841 = vsub.f32 %v724, %v840
    %v842 = vand.u32 %v841, 4294901760
    %v843 = vsub.f32 %v841, %v842
    %v844 = vand.u32 %v843, 4294901760
    %845 = vmatpush1.msra.mxu0 %v844
    %846 = vmatprep.subr.mxu0 0.0
    %v847 = vand.u32 %v725, 4294901760
    %v848 = vsub.f32 %v725, %v847
    %v849 = vand.u32 %v848, 4294901760
    %v850 = vsub.f32 %v848, %v849
    %v851 = vand.u32 %v850, 4294901760
    %852 = vmatpush1.msra.mxu0 %v851
    %853 = vmatprep.subr.mxu0 0.0
    %v854 = vand.u32 %v726, 4294901760
    %v855 = vsub.f32 %v726, %v854
    %v856 = vand.u32 %v855, 4294901760
    %v857 = vsub.f32 %v855, %v856
    %v858 = vand.u32 %v857, 4294901760
    %859 = vmatpush1.msra.mxu0 %v858
    %860 = vmatprep.subr.mxu0 0.0
    %v861 = vand.u32 %v727, 4294901760
    %v862 = vsub.f32 %v727, %v861
    %v863 = vand.u32 %v862, 4294901760
    %v864 = vsub.f32 %v862, %v863
    %v865 = vand.u32 %v864, 4294901760
    %866 = vmatpush1.msra.mxu0 %v865
    %867 = vmatprep.subr.mxu0 0.0
    %v868 = vand.u32 %v728, 4294901760
    %v869 = vsub.f32 %v728, %v868
    %v870 = vand.u32 %v869, 4294901760
    %v871 = vsub.f32 %v869, %v870
    %v872 = vand.u32 %v871, 4294901760
    %873 = vmatpush1.msra.mxu0 %v872
    %874 = vmatprep.subr.mxu0 0.0
    %v875 = vand.u32 %v729, 4294901760
    %v876 = vsub.f32 %v729, %v875
    %v877 = vand.u32 %v876, 4294901760
    %v878 = vsub.f32 %v876, %v877
    %v879 = vand.u32 %v878, 4294901760
    %880 = vmatpush1.msra.mxu0 %v879
    %881 = vmatprep.subr.mxu0 0.0
    %v882 = vand.u32 %v730, 4294901760
    %v883 = vsub.f32 %v730, %v882
    %v884 = vand.u32 %v883, 4294901760
    %v885 = vsub.f32 %v883, %v884
    %v886 = vand.u32 %v885, 4294901760
    %887 = vmatpush1.msra.mxu0 %v886
    %888 = vmatprep.subr.mxu0 0.0
    %v889 = vand.u32 %v731, 4294901760
    %v890 = vsub.f32 %v731, %v889
    %v891 = vand.u32 %v890, 4294901760
    %v892 = vsub.f32 %v890, %v891
    %v893 = vand.u32 %v892, 4294901760
    %894 = vmatpush1.msra.mxu0 %v893
    %895 = vmatprep.subr.mxu0 0.0
    %v896 = vand.u32 %v732, 4294901760
    %v897 = vsub.f32 %v732, %v896
    %v898 = vand.u32 %v897, 4294901760
    %v899 = vsub.f32 %v897, %v898
    %v900 = vand.u32 %v899, 4294901760
    %901 = vmatpush1.msra.mxu0 %v900
    %902 = vmatprep.subr.mxu0 0.0
    %v903 = vand.u32 %v733, 4294901760
    %v904 = vsub.f32 %v733, %v903
    %v905 = vand.u32 %v904, 4294901760
    %v906 = vsub.f32 %v904, %v905
    %v907 = vand.u32 %v906, 4294901760
    %908 = vmatpush1.msra.mxu0 %v907
    %909 = vmatprep.subr.mxu0 0.0
    %v910 = vand.u32 %v734, 4294901760
    %v911 = vsub.f32 %v734, %v910
    %v912 = vand.u32 %v911, 4294901760
    %v913 = vsub.f32 %v911, %v912
    %v914 = vand.u32 %v913, 4294901760
    %915 = vmatpush1.msra.mxu0 %v914
    %916 = vmatprep.subr.mxu0 0.0
    %v917 = vand.u32 %v735, 4294901760
    %v918 = vsub.f32 %v735, %v917
    %v919 = vand.u32 %v918, 4294901760
    %v920 = vsub.f32 %v918, %v919
    %v921 = vand.u32 %v920, 4294901760
    %922 = vmatpush1.msra.mxu0 %v921
    %923 = vmatprep.subr.mxu0 0.0
    %v924 = vand.u32 %v736, 4294901760
    %v925 = vsub.f32 %v736, %v924
    %v926 = vand.u32 %v925, 4294901760
    %v927 = vsub.f32 %v925, %v926
    %v928 = vand.u32 %v927, 4294901760
    %929 = vmatpush1.msra.mxu0 %v928
    %930 = vmatprep.subr.mxu0 0.0
    %v931 = vand.u32 %v737, 4294901760
    %v932 = vsub.f32 %v737, %v931
    %v933 = vand.u32 %v932, 4294901760
    %v934 = vsub.f32 %v932, %v933
    %v935 = vand.u32 %v934, 4294901760
    %936 = vmatpush1.msra.mxu0 %v935
    %937 = vmatprep.subr.mxu0 0.0
    %v938 = vand.u32 %v738, 4294901760
    %v939 = vsub.f32 %v738, %v938
    %v940 = vand.u32 %v939, 4294901760
    %v941 = vsub.f32 %v939, %v940
    %v942 = vand.u32 %v941, 4294901760
    %943 = vmatpush1.msra.mxu0 %v942
    %944 = vmatprep.subr.mxu0 0.0
    %v945 = vand.u32 %v739, 4294901760
    %v946 = vsub.f32 %v739, %v945
    %v947 = vand.u32 %v946, 4294901760
    %v948 = vsub.f32 %v946, %v947
    %v949 = vand.u32 %v948, 4294901760
    %950 = vmatpush1.msra.mxu0 %v949
    %951 = vmatprep.subr.mxu0 0.0
    %952 = vmatpush1.msra.mxu0 0.0
    %953 = vmatprep.subr.mxu0 0.0
    %954 = vmatpush1.msra.mxu0 0.0
    %955 = vmatprep.subr.mxu0 0.0
    %956 = vmatpush1.msra.mxu0 0.0
    %957 = vmatprep.subr.mxu0 0.0
    %958 = vmatpush1.msra.mxu0 0.0
    %959 = vmatprep.subr.mxu0 0.0
    %960 = vmatpush1.msra.mxu0 0.0
    %961 = vmatprep.subr.mxu0 0.0
    %962 = vmatpush1.msra.mxu0 0.0
    %963 = vmatprep.subr.mxu0 0.0
    %964 = vmatpush1.msra.mxu0 0.0
    %965 = vmatprep.subr.mxu0 0.0
    %966 = vmatpush1.msra.mxu0 0.0
    %967 = vmatprep.subr.mxu0 0.0
    %968 = vmatpush1.msra.mxu0 0.0
    %969 = vmatprep.subr.mxu0 0.0
    %970 = vmatpush1.msra.mxu0 0.0
    %971 = vmatprep.subr.mxu0 0.0
    %972 = vmatpush1.msra.mxu0 0.0
    %973 = vmatprep.subr.mxu0 0.0
    %974 = vmatpush1.msra.mxu0 0.0
    %975 = vmatprep.subr.mxu0 0.0
    %976 = vmatpush1.msra.mxu0 0.0
    %977 = vmatprep.subr.mxu0 0.0
    %978 = vmatpush1.msra.mxu0 0.0
    %979 = vmatprep.subr.mxu0 0.0
    %980 = vmatpush1.msra.mxu0 0.0
    %981 = vmatprep.subr.mxu0 0.0
    %982 = vmatpush1.msra.mxu0 0.0
    %983 = vmatprep.mubr.f32.mxu0 0.0
    %v984 = vand.u32 %v722, 4294901760
    %985 = vmatmul.mubr.f32.gmra.mrb[0].mxu0 %v984
    %v986 = vpop.f32.mrb[0].mxu0
    %v987 = vadd.f32 %v836, %v986
    %v988 = vpop.f32.mrb[0].mxu0
    %989 = vdwg.mxu0
    %990 = vmatprep.subr.mxu0 0.0
    %v991 = vand.u32 %v724, 4294901760
    %v992 = vsub.f32 %v724, %v991
    %993 = vmatpush1.msra.mxu0 %v992
    %994 = vmatprep.subr.mxu0 0.0
    %v995 = vand.u32 %v725, 4294901760
    %v996 = vsub.f32 %v725, %v995
    %997 = vmatpush1.msra.mxu0 %v996
    %998 = vmatprep.subr.mxu0 0.0
    %v999 = vand.u32 %v726, 4294901760
    %v1000 = vsub.f32 %v726, %v999
    %1001 = vmatpush1.msra.mxu0 %v1000
    %1002 = vmatprep.subr.mxu0 0.0
    %v1003 = vand.u32 %v727, 4294901760
    %v1004 = vsub.f32 %v727, %v1003
    %1005 = vmatpush1.msra.mxu0 %v1004
    %1006 = vmatprep.subr.mxu0 0.0
    %v1007 = vand.u32 %v728, 4294901760
    %v1008 = vsub.f32 %v728, %v1007
    %1009 = vmatpush1.msra.mxu0 %v1008
    %1010 = vmatprep.subr.mxu0 0.0
    %v1011 = vand.u32 %v729, 4294901760
    %v1012 = vsub.f32 %v729, %v1011
    %1013 = vmatpush1.msra.mxu0 %v1012
    %1014 = vmatprep.subr.mxu0 0.0
    %v1015 = vand.u32 %v730, 4294901760
    %v1016 = vsub.f32 %v730, %v1015
    %1017 = vmatpush1.msra.mxu0 %v1016
    %1018 = vmatprep.subr.mxu0 0.0
    %v1019 = vand.u32 %v731, 4294901760
    %v1020 = vsub.f32 %v731, %v1019
    %1021 = vmatpush1.msra.mxu0 %v1020
    %1022 = vmatprep.subr.mxu0 0.0
    %v1023 = vand.u32 %v732, 4294901760
    %v1024 = vsub.f32 %v732, %v1023
    %1025 = vmatpush1.msra.mxu0 %v1024
    %1026 = vmatprep.subr.mxu0 0.0
    %v1027 = vand.u32 %v733, 4294901760
    %v1028 = vsub.f32 %v733, %v1027
    %1029 = vmatpush1.msra.mxu0 %v1028
    %1030 = vmatprep.subr.mxu0 0.0
    %v1031 = vand.u32 %v734, 4294901760
    %v1032 = vsub.f32 %v734, %v1031
    %1033 = vmatpush1.msra.mxu0 %v1032
    %1034 = vmatprep.subr.mxu0 0.0
    %v1035 = vand.u32 %v735, 4294901760
    %v1036 = vsub.f32 %v735, %v1035
    %1037 = vmatpush1.msra.mxu0 %v1036
    %1038 = vmatprep.subr.mxu0 0.0
    %v1039 = vand.u32 %v736, 4294901760
    %v1040 = vsub.f32 %v736, %v1039
    %1041 = vmatpush1.msra.mxu0 %v1040
    %1042 = vmatprep.subr.mxu0 0.0
    %v1043 = vand.u32 %v737, 4294901760
    %v1044 = vsub.f32 %v737, %v1043
    %1045 = vmatpush1.msra.mxu0 %v1044
    %1046 = vmatprep.subr.mxu0 0.0
    %v1047 = vand.u32 %v738, 4294901760
    %v1048 = vsub.f32 %v738, %v1047
    %1049 = vmatpush1.msra.mxu0 %v1048
    %1050 = vmatprep.subr.mxu0 0.0
    %v1051 = vand.u32 %v739, 4294901760
    %v1052 = vsub.f32 %v739, %v1051
    %1053 = vmatpush1.msra.mxu0 %v1052
    %1054 = vmatprep.subr.mxu0 0.0
    %1055 = vmatpush1.msra.mxu0 0.0
    %1056 = vmatprep.subr.mxu0 0.0
    %1057 = vmatpush1.msra.mxu0 0.0
    %1058 = vmatprep.subr.mxu0 0.0
    %1059 = vmatpush1.msra.mxu0 0.0
    %1060 = vmatprep.subr.mxu0 0.0
    %1061 = vmatpush1.msra.mxu0 0.0
    %1062 = vmatprep.subr.mxu0 0.0
    %1063 = vmatpush1.msra.mxu0 0.0
    %1064 = vmatprep.subr.mxu0 0.0
    %1065 = vmatpush1.msra.mxu0 0.0
    %1066 = vmatprep.subr.mxu0 0.0
    %1067 = vmatpush1.msra.mxu0 0.0
    %1068 = vmatprep.subr.mxu0 0.0
    %1069 = vmatpush1.msra.mxu0 0.0
    %1070 = vmatprep.subr.mxu0 0.0
    %1071 = vmatpush1.msra.mxu0 0.0
    %1072 = vmatprep.subr.mxu0 0.0
    %1073 = vmatpush1.msra.mxu0 0.0
    %1074 = vmatprep.subr.mxu0 0.0
    %1075 = vmatpush1.msra.mxu0 0.0
    %1076 = vmatprep.subr.mxu0 0.0
    %1077 = vmatpush1.msra.mxu0 0.0
    %1078 = vmatprep.subr.mxu0 0.0
    %1079 = vmatpush1.msra.mxu0 0.0
    %1080 = vmatprep.subr.mxu0 0.0
    %1081 = vmatpush1.msra.mxu0 0.0
    %1082 = vmatprep.subr.mxu0 0.0
    %1083 = vmatpush1.msra.mxu0 0.0
    %1084 = vmatprep.subr.mxu0 0.0
    %1085 = vmatpush1.msra.mxu0 0.0
    %1086 = vmatprep.mubr.f32.mxu0 0.0
    %v1087 = vand.u32 %v722, 4294901760
    %v1088 = vsub.f32 %v722, %v1087
    %1089 = vmatmul.mubr.f32.gmra.mrb[0].mxu0 %v1088
    %v1090 = vpop.f32.mrb[0].mxu0
    %v1091 = vadd.f32 %v987, %v1090
    %v1092 = vpop.f32.mrb[0].mxu0
    %1093 = vdwg.mxu0
    %1094 = vmatprep.subr.mxu0 0.0
    %v1095 = vand.u32 %v724, 4294901760
    %1096 = vmatpush1.msra.mxu0 %v1095
    %1097 = vmatprep.subr.mxu0 0.0
    %v1098 = vand.u32 %v725, 4294901760
    %1099 = vmatpush1.msra.mxu0 %v1098
    %1100 = vmatprep.subr.mxu0 0.0
    %v1101 = vand.u32 %v726, 4294901760
    %1102 = vmatpush1.msra.mxu0 %v1101
    %1103 = vmatprep.subr.mxu0 0.0
    %v1104 = vand.u32 %v727, 4294901760
    %1105 = vmatpush1.msra.mxu0 %v1104
    %1106 = vmatprep.subr.mxu0 0.0
    %v1107 = vand.u32 %v728, 4294901760
    %1108 = vmatpush1.msra.mxu0 %v1107
    %1109 = vmatprep.subr.mxu0 0.0
    %v1110 = vand.u32 %v729, 4294901760
    %1111 = vmatpush1.msra.mxu0 %v1110
    %1112 = vmatprep.subr.mxu0 0.0
    %v1113 = vand.u32 %v730, 4294901760
    %1114 = vmatpush1.msra.mxu0 %v1113
    %1115 = vmatprep.subr.mxu0 0.0
    %v1116 = vand.u32 %v731, 4294901760
    %1117 = vmatpush1.msra.mxu0 %v1116
    %1118 = vmatprep.subr.mxu0 0.0
    %v1119 = vand.u32 %v732, 4294901760
    %1120 = vmatpush1.msra.mxu0 %v1119
    %1121 = vmatprep.subr.mxu0 0.0
    %v1122 = vand.u32 %v733, 4294901760
    %1123 = vmatpush1.msra.mxu0 %v1122
    %1124 = vmatprep.subr.mxu0 0.0
    %v1125 = vand.u32 %v734, 4294901760
    %1126 = vmatpush1.msra.mxu0 %v1125
    %1127 = vmatprep.subr.mxu0 0.0
    %v1128 = vand.u32 %v735, 4294901760
    %1129 = vmatpush1.msra.mxu0 %v1128
    %1130 = vmatprep.subr.mxu0 0.0
    %v1131 = vand.u32 %v736, 4294901760
    %1132 = vmatpush1.msra.mxu0 %v1131
    %1133 = vmatprep.subr.mxu0 0.0
    %v1134 = vand.u32 %v737, 4294901760
    %1135 = vmatpush1.msra.mxu0 %v1134
    %1136 = vmatprep.subr.mxu0 0.0
    %v1137 = vand.u32 %v738, 4294901760
    %1138 = vmatpush1.msra.mxu0 %v1137
    %1139 = vmatprep.subr.mxu0 0.0
    %v1140 = vand.u32 %v739, 4294901760
    %1141 = vmatpush1.msra.mxu0 %v1140
    %1142 = vmatprep.subr.mxu0 0.0
    %1143 = vmatpush1.msra.mxu0 0.0
    %1144 = vmatprep.subr.mxu0 0.0
    %1145 = vmatpush1.msra.mxu0 0.0
    %1146 = vmatprep.subr.mxu0 0.0
    %1147 = vmatpush1.msra.mxu0 0.0
    %1148 = vmatprep.subr.mxu0 0.0
    %1149 = vmatpush1.msra.mxu0 0.0
    %1150 = vmatprep.subr.mxu0 0.0
    %1151 = vmatpush1.msra.mxu0 0.0
    %1152 = vmatprep.subr.mxu0 0.0
    %1153 = vmatpush1.msra.mxu0 0.0
    %1154 = vmatprep.subr.mxu0 0.0
    %1155 = vmatpush1.msra.mxu0 0.0
    %1156 = vmatprep.subr.mxu0 0.0
    %1157 = vmatpush1.msra.mxu0 0.0
    %1158 = vmatprep.subr.mxu0 0.0
    %1159 = vmatpush1.msra.mxu0 0.0
    %1160 = vmatprep.subr.mxu0 0.0
    %1161 = vmatpush1.msra.mxu0 0.0
    %1162 = vmatprep.subr.mxu0 0.0
    %1163 = vmatpush1.msra.mxu0 0.0
    %1164 = vmatprep.subr.mxu0 0.0
    %1165 = vmatpush1.msra.mxu0 0.0
    %1166 = vmatprep.subr.mxu0 0.0
    %1167 = vmatpush1.msra.mxu0 0.0
    %1168 = vmatprep.subr.mxu0 0.0
    %1169 = vmatpush1.msra.mxu0 0.0
    %1170 = vmatprep.subr.mxu0 0.0
    %1171 = vmatpush1.msra.mxu0 0.0
    %1172 = vmatprep.subr.mxu0 0.0
    %1173 = vmatpush1.msra.mxu0 0.0
    %1174 = vmatprep.mubr.f32.mxu0 0.0
    %v1175 = vand.u32 %v722, 4294901760
    %v1176 = vsub.f32 %v722, %v1175
    %v1177 = vand.u32 %v1176, 4294901760
    %1178 = vmatmul.mubr.f32.gmra.mrb[0].mxu0 %v1177
    %v1179 = vpop.f32.mrb[0].mxu0
    %v1180 = vadd.f32 %v1091, %v1179
    %v1181 = vpop.f32.mrb[0].mxu0
    %1182 = vdwg.mxu0
    %1183 = vmatprep.subr.mxu0 0.0
    %v1184 = vand.u32 %v724, 4294901760
    %v1185 = vsub.f32 %v724, %v1184
    %v1186 = vand.u32 %v1185, 4294901760
    %1187 = vmatpush1.msra.mxu0 %v1186
    %1188 = vmatprep.subr.mxu0 0.0
    %v1189 = vand.u32 %v725, 4294901760
    %v1190 = vsub.f32 %v725, %v1189
    %v1191 = vand.u32 %v1190, 4294901760
    %1192 = vmatpush1.msra.mxu0 %v1191
    %1193 = vmatprep.subr.mxu0 0.0
    %v1194 = vand.u32 %v726, 4294901760
    %v1195 = vsub.f32 %v726, %v1194
    %v1196 = vand.u32 %v1195, 4294901760
    %1197 = vmatpush1.msra.mxu0 %v1196
    %1198 = vmatprep.subr.mxu0 0.0
    %v1199 = vand.u32 %v727, 4294901760
    %v1200 = vsub.f32 %v727, %v1199
    %v1201 = vand.u32 %v1200, 4294901760
    %1202 = vmatpush1.msra.mxu0 %v1201
    %1203 = vmatprep.subr.mxu0 0.0
    %v1204 = vand.u32 %v728, 4294901760
    %v1205 = vsub.f32 %v728, %v1204
    %v1206 = vand.u32 %v1205, 4294901760
    %1207 = vmatpush1.msra.mxu0 %v1206
    %1208 = vmatprep.subr.mxu0 0.0
    %v1209 = vand.u32 %v729, 4294901760
    %v1210 = vsub.f32 %v729, %v1209
    %v1211 = vand.u32 %v1210, 4294901760
    %1212 = vmatpush1.msra.mxu0 %v1211
    %1213 = vmatprep.subr.mxu0 0.0
    %v1214 = vand.u32 %v730, 4294901760
    %v1215 = vsub.f32 %v730, %v1214
    %v1216 = vand.u32 %v1215, 4294901760
    %1217 = vmatpush1.msra.mxu0 %v1216
    %1218 = vmatprep.subr.mxu0 0.0
    %v1219 = vand.u32 %v731, 4294901760
    %v1220 = vsub.f32 %v731, %v1219
    %v1221 = vand.u32 %v1220, 4294901760
    %1222 = vmatpush1.msra.mxu0 %v1221
    %1223 = vmatprep.subr.mxu0 0.0
    %v1224 = vand.u32 %v732, 4294901760
    %v1225 = vsub.f32 %v732, %v1224
    %v1226 = vand.u32 %v1225, 4294901760
    %1227 = vmatpush1.msra.mxu0 %v1226
    %1228 = vmatprep.subr.mxu0 0.0
    %v1229 = vand.u32 %v733, 4294901760
    %v1230 = vsub.f32 %v733, %v1229
    %v1231 = vand.u32 %v1230, 4294901760
    %1232 = vmatpush1.msra.mxu0 %v1231
    %1233 = vmatprep.subr.mxu0 0.0
    %v1234 = vand.u32 %v734, 4294901760
    %v1235 = vsub.f32 %v734, %v1234
    %v1236 = vand.u32 %v1235, 4294901760
    %1237 = vmatpush1.msra.mxu0 %v1236
    %1238 = vmatprep.subr.mxu0 0.0
    %v1239 = vand.u32 %v735, 4294901760
    %v1240 = vsub.f32 %v735, %v1239
    %v1241 = vand.u32 %v1240, 4294901760
    %1242 = vmatpush1.msra.mxu0 %v1241
    %1243 = vmatprep.subr.mxu0 0.0
    %v1244 = vand.u32 %v736, 4294901760
    %v1245 = vsub.f32 %v736, %v1244
    %v1246 = vand.u32 %v1245, 4294901760
    %1247 = vmatpush1.msra.mxu0 %v1246
    %1248 = vmatprep.subr.mxu0 0.0
    %v1249 = vand.u32 %v737, 4294901760
    %v1250 = vsub.f32 %v737, %v1249
    %v1251 = vand.u32 %v1250, 4294901760
    %1252 = vmatpush1.msra.mxu0 %v1251
    %1253 = vmatprep.subr.mxu0 0.0
    %v1254 = vand.u32 %v738, 4294901760
    %v1255 = vsub.f32 %v738, %v1254
    %v1256 = vand.u32 %v1255, 4294901760
    %1257 = vmatpush1.msra.mxu0 %v1256
    %1258 = vmatprep.subr.mxu0 0.0
    %v1259 = vand.u32 %v739, 4294901760
    %v1260 = vsub.f32 %v739, %v1259
    %v1261 = vand.u32 %v1260, 4294901760
    %1262 = vmatpush1.msra.mxu0 %v1261
    %1263 = vmatprep.subr.mxu0 0.0
    %1264 = vmatpush1.msra.mxu0 0.0
    %1265 = vmatprep.subr.mxu0 0.0
    %1266 = vmatpush1.msra.mxu0 0.0
    %1267 = vmatprep.subr.mxu0 0.0
    %1268 = vmatpush1.msra.mxu0 0.0
    %1269 = vmatprep.subr.mxu0 0.0
    %1270 = vmatpush1.msra.mxu0 0.0
    %1271 = vmatprep.subr.mxu0 0.0
    %1272 = vmatpush1.msra.mxu0 0.0
    %1273 = vmatprep.subr.mxu0 0.0
    %1274 = vmatpush1.msra.mxu0 0.0
    %1275 = vmatprep.subr.mxu0 0.0
    %1276 = vmatpush1.msra.mxu0 0.0
    %1277 = vmatprep.subr.mxu0 0.0
    %1278 = vmatpush1.msra.mxu0 0.0
    %1279 = vmatprep.subr.mxu0 0.0
    %1280 = vmatpush1.msra.mxu0 0.0
    %1281 = vmatprep.subr.mxu0 0.0
    %1282 = vmatpush1.msra.mxu0 0.0
    %1283 = vmatprep.subr.mxu0 0.0
    %1284 = vmatpush1.msra.mxu0 0.0
    %1285 = vmatprep.subr.mxu0 0.0
    %1286 = vmatpush1.msra.mxu0 0.0
    %1287 = vmatprep.subr.mxu0 0.0
    %1288 = vmatpush1.msra.mxu0 0.0
    %1289 = vmatprep.subr.mxu0 0.0
    %1290 = vmatpush1.msra.mxu0 0.0
    %1291 = vmatprep.subr.mxu0 0.0
    %1292 = vmatpush1.msra.mxu0 0.0
    %1293 = vmatprep.subr.mxu0 0.0
    %1294 = vmatpush1.msra.mxu0 0.0
    %1295 = vmatprep.mubr.f32.mxu0 0.0
    %v1296 = vand.u32 %v722, 4294901760
    %1297 = vmatmul.mubr.f32.gmra.mrb[0].mxu0 %v1296
    %v1298 = vpop.f32.mrb[0].mxu0
    %v1299 = vadd.f32 %v1180, %v1298
    %v1300 = vpop.f32.mrb[0].mxu0
    %1301 = vdwg.mxu0
    %1302 = vmatprep.subr.mxu0 0.0
    %v1303 = vand.u32 %v724, 4294901760
    %1304 = vmatpush1.msra.mxu0 %v1303
    %1305 = vmatprep.subr.mxu0 0.0
    %v1306 = vand.u32 %v725, 4294901760
    %1307 = vmatpush1.msra.mxu0 %v1306
    %1308 = vmatprep.subr.mxu0 0.0
    %v1309 = vand.u32 %v726, 4294901760
    %1310 = vmatpush1.msra.mxu0 %v1309
    %1311 = vmatprep.subr.mxu0 0.0
    %v1312 = vand.u32 %v727, 4294901760
    %1313 = vmatpush1.msra.mxu0 %v1312
    %1314 = vmatprep.subr.mxu0 0.0
    %v1315 = vand.u32 %v728, 4294901760
    %1316 = vmatpush1.msra.mxu0 %v1315
    %1317 = vmatprep.subr.mxu0 0.0
    %v1318 = vand.u32 %v729, 4294901760
    %1319 = vmatpush1.msra.mxu0 %v1318
    %1320 = vmatprep.subr.mxu0 0.0
    %v1321 = vand.u32 %v730, 4294901760
    %1322 = vmatpush1.msra.mxu0 %v1321
    %1323 = vmatprep.subr.mxu0 0.0
    %v1324 = vand.u32 %v731, 4294901760
    %1325 = vmatpush1.msra.mxu0 %v1324
    %1326 = vmatprep.subr.mxu0 0.0
    %v1327 = vand.u32 %v732, 4294901760
    %1328 = vmatpush1.msra.mxu0 %v1327
    %1329 = vmatprep.subr.mxu0 0.0
    %v1330 = vand.u32 %v733, 4294901760
    %1331 = vmatpush1.msra.mxu0 %v1330
    %1332 = vmatprep.subr.mxu0 0.0
    %v1333 = vand.u32 %v734, 4294901760
    %1334 = vmatpush1.msra.mxu0 %v1333
    %1335 = vmatprep.subr.mxu0 0.0
    %v1336 = vand.u32 %v735, 4294901760
    %1337 = vmatpush1.msra.mxu0 %v1336
    %1338 = vmatprep.subr.mxu0 0.0
    %v1339 = vand.u32 %v736, 4294901760
    %1340 = vmatpush1.msra.mxu0 %v1339
    %1341 = vmatprep.subr.mxu0 0.0
    %v1342 = vand.u32 %v737, 4294901760
    %1343 = vmatpush1.msra.mxu0 %v1342
    %1344 = vmatprep.subr.mxu0 0.0
    %v1345 = vand.u32 %v738, 4294901760
    %1346 = vmatpush1.msra.mxu0 %v1345
    %1347 = vmatprep.subr.mxu0 0.0
    %v1348 = vand.u32 %v739, 4294901760
    %1349 = vmatpush1.msra.mxu0 %v1348
    %1350 = vmatprep.subr.mxu0 0.0
    %1351 = vmatpush1.msra.mxu0 0.0
    %1352 = vmatprep.subr.mxu0 0.0
    %1353 = vmatpush1.msra.mxu0 0.0
    %1354 = vmatprep.subr.mxu0 0.0
    %1355 = vmatpush1.msra.mxu0 0.0
    %1356 = vmatprep.subr.mxu0 0.0
    %1357 = vmatpush1.msra.mxu0 0.0
    %1358 = vmatprep.subr.mxu0 0.0
    %1359 = vmatpush1.msra.mxu0 0.0
    %1360 = vmatprep.subr.mxu0 0.0
    %1361 = vmatpush1.msra.mxu0 0.0
    %1362 = vmatprep.subr.mxu0 0.0
    %1363 = vmatpush1.msra.mxu0 0.0
    %1364 = vmatprep.subr.mxu0 0.0
    %1365 = vmatpush1.msra.mxu0 0.0
    %1366 = vmatprep.subr.mxu0 0.0
    %1367 = vmatpush1.msra.mxu0 0.0
    %1368 = vmatprep.subr.mxu0 0.0
    %1369 = vmatpush1.msra.mxu0 0.0
    %1370 = vmatprep.subr.mxu0 0.0
    %1371 = vmatpush1.msra.mxu0 0.0
    %1372 = vmatprep.subr.mxu0 0.0
    %1373 = vmatpush1.msra.mxu0 0.0
    %1374 = vmatprep.subr.mxu0 0.0
    %1375 = vmatpush1.msra.mxu0 0.0
    %1376 = vmatprep.subr.mxu0 0.0
    %1377 = vmatpush1.msra.mxu0 0.0
    %1378 = vmatprep.subr.mxu0 0.0
    %1379 = vmatpush1.msra.mxu0 0.0
    %1380 = vmatprep.subr.mxu0 0.0
    %1381 = vmatpush1.msra.mxu0 0.0
    %1382 = vmatprep.mubr.f32.mxu0 0.0
    %v1383 = vand.u32 %v722, 4294901760
    %1384 = vmatmul.mubr.f32.gmra.mrb[0].mxu0 %v1383
    %v1385 = vpop.f32.mrb[0].mxu0
    %v1386 = vadd.f32 %v1299, %v1385
    %v1387 = vpop.f32.mrb[0].mxu0
    %1388 = vdwg.mxu0
    %v1389 = vmax.f32 %v1386, 0.0
    %v1390 = vld [vmem:[#allocation7] sm:$0xff]
    %v1391 = vld [vmem:[#allocation7 + $0x8] sm:$0xff]
    %v1392 = vld [vmem:[#allocation7 + $0x10] sm:$0xff]
    %v1393 = vld [vmem:[#allocation7 + $0x18] sm:$0xff]
    %v1394 = vld [vmem:[#allocation7 + $0x20] sm:$0xff]
    %v1395 = vld [vmem:[#allocation7 + $0x28] sm:$0xff]
    %v1396 = vld [vmem:[#allocation7 + $0x30] sm:$0xff]
    %v1397 = vld [vmem:[#allocation7 + $0x38] sm:$0xff]
    %v1398 = vld [vmem:[#allocation7 + $0x40] sm:$0xff]
    %v1399 = vld [vmem:[#allocation7 + $0x48] sm:$0xff]
    %v1400 = vld [vmem:[#allocation7 + $0x50] sm:$0xff]
    %v1401 = vld [vmem:[#allocation7 + $0x58] sm:$0xff]
    %v1402 = vld [vmem:[#allocation7 + $0x60] sm:$0xff]
    %v1403 = vld [vmem:[#allocation7 + $0x68] sm:$0xff]
    %v1404 = vld [vmem:[#allocation7 + $0x70] sm:$0xff]
    %v1405 = vld [vmem:[#allocation7 + $0x78] sm:$0xff]
    %v1406 = vld [vmem:[#allocation7 + $0x80] sm:$0xff]
    %v1407 = vld [vmem:[#allocation7 + $0x88] sm:$0xff]
    %v1408 = vld [vmem:[#allocation7 + $0x90] sm:$0xff]
    %v1409 = vld [vmem:[#allocation7 + $0x98] sm:$0xff]
    %v1410 = vld [vmem:[#allocation7 + $0xa0] sm:$0xff]
    %v1411 = vld [vmem:[#allocation7 + $0xa8] sm:$0xff]
    %v1412 = vld [vmem:[#allocation7 + $0xb0] sm:$0xff]
    %v1413 = vld [vmem:[#allocation7 + $0xb8] sm:$0xff]
    %v1414 = vld [vmem:[#allocation7 + $0xc0] sm:$0xff]
    %v1415 = vld [vmem:[#allocation7 + $0xc8] sm:$0xff]
    %v1416 = vld [vmem:[#allocation7 + $0xd0] sm:$0xff]
    %v1417 = vld [vmem:[#allocation7 + $0xd8] sm:$0xff]
    %v1418 = vld [vmem:[#allocation7 + $0xe0] sm:$0xff]
    %v1419 = vld [vmem:[#allocation7 + $0xe8] sm:$0xff]
    %v1420 = vld [vmem:[#allocation7 + $0xf0] sm:$0xff]
    %v1421 = vld [vmem:[#allocation7 + $0xf8] sm:$0xff]
    %s1422 = scalar_lea.vmem %s2, 2
    %v1423 = vld [vmem:[%s1422] sm:$0x1]
    %v1425 = vlaneseq
    %v1426 = vshrl.u32 %v1425, 7
    %v1427 = vsub.s32 0, %v1426
    %v1428 = vrot.slane %v1423, %v1427
    %1430 = vmatprep.subr.mxu0 0.0
    %v1431 = vand.u32 %v1390, 4294901760
    %1432 = vmatpush1.msra.mxu0 %v1431
    %1433 = vmatprep.subr.mxu0 0.0
    %v1434 = vand.u32 %v1391, 4294901760
    %1435 = vmatpush1.msra.mxu0 %v1434
    %1436 = vmatprep.subr.mxu0 0.0
    %v1437 = vand.u32 %v1392, 4294901760
    %1438 = vmatpush1.msra.mxu0 %v1437
    %1439 = vmatprep.subr.mxu0 0.0
    %v1440 = vand.u32 %v1393, 4294901760
    %1441 = vmatpush1.msra.mxu0 %v1440
    %1442 = vmatprep.subr.mxu0 0.0
    %v1443 = vand.u32 %v1394, 4294901760
    %1444 = vmatpush1.msra.mxu0 %v1443
    %1445 = vmatprep.subr.mxu0 0.0
    %v1446 = vand.u32 %v1395, 4294901760
    %1447 = vmatpush1.msra.mxu0 %v1446
    %1448 = vmatprep.subr.mxu0 0.0
    %v1449 = vand.u32 %v1396, 4294901760
    %1450 = vmatpush1.msra.mxu0 %v1449
    %1451 = vmatprep.subr.mxu0 0.0
    %v1452 = vand.u32 %v1397, 4294901760
    %1453 = vmatpush1.msra.mxu0 %v1452
    %1454 = vmatprep.subr.mxu0 0.0
    %v1455 = vand.u32 %v1398, 4294901760
    %1456 = vmatpush1.msra.mxu0 %v1455
    %1457 = vmatprep.subr.mxu0 0.0
    %v1458 = vand.u32 %v1399, 4294901760
    %1459 = vmatpush1.msra.mxu0 %v1458
    %1460 = vmatprep.subr.mxu0 0.0
    %v1461 = vand.u32 %v1400, 4294901760
    %1462 = vmatpush1.msra.mxu0 %v1461
    %1463 = vmatprep.subr.mxu0 0.0
    %v1464 = vand.u32 %v1401, 4294901760
    %1465 = vmatpush1.msra.mxu0 %v1464
    %1466 = vmatprep.subr.mxu0 0.0
    %v1467 = vand.u32 %v1402, 4294901760
    %1468 = vmatpush1.msra.mxu0 %v1467
    %1469 = vmatprep.subr.mxu0 0.0
    %v1470 = vand.u32 %v1403, 4294901760
    %1471 = vmatpush1.msra.mxu0 %v1470
    %1472 = vmatprep.subr.mxu0 0.0
    %v1473 = vand.u32 %v1404, 4294901760
    %1474 = vmatpush1.msra.mxu0 %v1473
    %1475 = vmatprep.subr.mxu0 0.0
    %v1476 = vand.u32 %v1405, 4294901760
    %1477 = vmatpush1.msra.mxu0 %v1476
    %1478 = vmatprep.subr.mxu0 0.0
    %v1479 = vand.u32 %v1406, 4294901760
    %1480 = vmatpush1.msra.mxu0 %v1479
    %1481 = vmatprep.subr.mxu0 0.0
    %v1482 = vand.u32 %v1407, 4294901760
    %1483 = vmatpush1.msra.mxu0 %v1482
    %1484 = vmatprep.subr.mxu0 0.0
    %v1485 = vand.u32 %v1408, 4294901760
    %1486 = vmatpush1.msra.mxu0 %v1485
    %1487 = vmatprep.subr.mxu0 0.0
    %v1488 = vand.u32 %v1409, 4294901760
    %1489 = vmatpush1.msra.mxu0 %v1488
    %1490 = vmatprep.subr.mxu0 0.0
    %v1491 = vand.u32 %v1410, 4294901760
    %1492 = vmatpush1.msra.mxu0 %v1491
    %1493 = vmatprep.subr.mxu0 0.0
    %v1494 = vand.u32 %v1411, 4294901760
    %1495 = vmatpush1.msra.mxu0 %v1494
    %1496 = vmatprep.subr.mxu0 0.0
    %v1497 = vand.u32 %v1412, 4294901760
    %1498 = vmatpush1.msra.mxu0 %v1497
    %1499 = vmatprep.subr.mxu0 0.0
    %v1500 = vand.u32 %v1413, 4294901760
    %1501 = vmatpush1.msra.mxu0 %v1500
    %1502 = vmatprep.subr.mxu0 0.0
    %v1503 = vand.u32 %v1414, 4294901760
    %1504 = vmatpush1.msra.mxu0 %v1503
    %1505 = vmatprep.subr.mxu0 0.0
    %v1506 = vand.u32 %v1415, 4294901760
    %1507 = vmatpush1.msra.mxu0 %v1506
    %1508 = vmatprep.subr.mxu0 0.0
    %v1509 = vand.u32 %v1416, 4294901760
    %1510 = vmatpush1.msra.mxu0 %v1509
    %1511 = vmatprep.subr.mxu0 0.0
    %v1512 = vand.u32 %v1417, 4294901760
    %1513 = vmatpush1.msra.mxu0 %v1512
    %1514 = vmatprep.subr.mxu0 0.0
    %v1515 = vand.u32 %v1418, 4294901760
    %1516 = vmatpush1.msra.mxu0 %v1515
    %1517 = vmatprep.subr.mxu0 0.0
    %v1518 = vand.u32 %v1419, 4294901760
    %1519 = vmatpush1.msra.mxu0 %v1518
    %1520 = vmatprep.subr.mxu0 0.0
    %v1521 = vand.u32 %v1420, 4294901760
    %1522 = vmatpush1.msra.mxu0 %v1521
    %1523 = vmatprep.subr.mxu0 0.0
    %v1524 = vand.u32 %v1421, 4294901760
    %1525 = vmatpush1.msra.mxu0 %v1524
    %v1526 = vand.u32 %v57, 4294901760
    %v1527 = vsub.f32 %v57, %v1526
    %v1528 = vand.u32 %v1527, 4294901760
    %v1529 = vsub.f32 %v1527, %v1528
    %v1530 = vand.u32 %v1529, 4294901760
    %1531 = vmatprep.mubr.f32.mxu0 %v1530
    %v1532 = vand.u32 %v1389, 4294901760
    %v1533 = vsub.f32 %v1389, %v1532
    %v1534 = vand.u32 %v1533, 4294901760
    %v1535 = vsub.f32 %v1533, %v1534
    %v1536 = vand.u32 %v1535, 4294901760
    %1537 = vmatmul.mubr.f32.gmra.mrb[0].mxu0 %v1536
    %v1538 = vpop.f32.mrb[0].mxu0
    %v1539 = vadd.f32 %v1428, %v1538
    %v1540 = vpop.f32.mrb[0].mxu0
    %1541 = vdwg.mxu0
    %1542 = vmatprep.subr.mxu0 0.0
    %v1543 = vand.u32 %v1390, 4294901760
    %v1544 = vsub.f32 %v1390, %v1543
    %v1545 = vand.u32 %v1544, 4294901760
    %v1546 = vsub.f32 %v1544, %v1545
    %v1547 = vand.u32 %v1546, 4294901760
    %1548 = vmatpush1.msra.mxu0 %v1547
    %1549 = vmatprep.subr.mxu0 0.0
    %v1550 = vand.u32 %v1391, 4294901760
    %v1551 = vsub.f32 %v1391, %v1550
    %v1552 = vand.u32 %v1551, 4294901760
    %v1553 = vsub.f32 %v1551, %v1552
    %v1554 = vand.u32 %v1553, 4294901760
    %1555 = vmatpush1.msra.mxu0 %v1554
    %1556 = vmatprep.subr.mxu0 0.0
    %v1557 = vand.u32 %v1392, 4294901760
    %v1558 = vsub.f32 %v1392, %v1557
    %v1559 = vand.u32 %v1558, 4294901760
    %v1560 = vsub.f32 %v1558, %v1559
    %v1561 = vand.u32 %v1560, 4294901760
    %1562 = vmatpush1.msra.mxu0 %v1561
    %1563 = vmatprep.subr.mxu0 0.0
    %v1564 = vand.u32 %v1393, 4294901760
    %v1565 = vsub.f32 %v1393, %v1564
    %v1566 = vand.u32 %v1565, 4294901760
    %v1567 = vsub.f32 %v1565, %v1566
    %v1568 = vand.u32 %v1567, 4294901760
    %1569 = vmatpush1.msra.mxu0 %v1568
    %1570 = vmatprep.subr.mxu0 0.0
    %v1571 = vand.u32 %v1394, 4294901760
    %v1572 = vsub.f32 %v1394, %v1571
    %v1573 = vand.u32 %v1572, 4294901760
    %v1574 = vsub.f32 %v1572, %v1573
    %v1575 = vand.u32 %v1574, 4294901760
    %1576 = vmatpush1.msra.mxu0 %v1575
    %1577 = vmatprep.subr.mxu0 0.0
    %v1578 = vand.u32 %v1395, 4294901760
    %v1579 = vsub.f32 %v1395, %v1578
    %v1580 = vand.u32 %v1579, 4294901760
    %v1581 = vsub.f32 %v1579, %v1580
    %v1582 = vand.u32 %v1581, 4294901760
    %1583 = vmatpush1.msra.mxu0 %v1582
    %1584 = vmatprep.subr.mxu0 0.0
    %v1585 = vand.u32 %v1396, 4294901760
    %v1586 = vsub.f32 %v1396, %v1585
    %v1587 = vand.u32 %v1586, 4294901760
    %v1588 = vsub.f32 %v1586, %v1587
    %v1589 = vand.u32 %v1588, 4294901760
    %1590 = vmatpush1.msra.mxu0 %v1589
    %1591 = vmatprep.subr.mxu0 0.0
    %v1592 = vand.u32 %v1397, 4294901760
    %v1593 = vsub.f32 %v1397, %v1592
    %v1594 = vand.u32 %v1593, 4294901760
    %v1595 = vsub.f32 %v1593, %v1594
    %v1596 = vand.u32 %v1595, 4294901760
    %1597 = vmatpush1.msra.mxu0 %v1596
    %1598 = vmatprep.subr.mxu0 0.0
    %v1599 = vand.u32 %v1398, 4294901760
    %v1600 = vsub.f32 %v1398, %v1599
    %v1601 = vand.u32 %v1600, 4294901760
    %v1602 = vsub.f32 %v1600, %v1601
    %v1603 = vand.u32 %v1602, 4294901760
    %1604 = vmatpush1.msra.mxu0 %v1603
    %1605 = vmatprep.subr.mxu0 0.0
    %v1606 = vand.u32 %v1399, 4294901760
    %v1607 = vsub.f32 %v1399, %v1606
    %v1608 = vand.u32 %v1607, 4294901760
    %v1609 = vsub.f32 %v1607, %v1608
    %v1610 = vand.u32 %v1609, 4294901760
    %1611 = vmatpush1.msra.mxu0 %v1610
    %1612 = vmatprep.subr.mxu0 0.0
    %v1613 = vand.u32 %v1400, 4294901760
    %v1614 = vsub.f32 %v1400, %v1613
    %v1615 = vand.u32 %v1614, 4294901760
    %v1616 = vsub.f32 %v1614, %v1615
    %v1617 = vand.u32 %v1616, 4294901760
    %1618 = vmatpush1.msra.mxu0 %v1617
    %1619 = vmatprep.subr.mxu0 0.0
    %v1620 = vand.u32 %v1401, 4294901760
    %v1621 = vsub.f32 %v1401, %v1620
    %v1622 = vand.u32 %v1621, 4294901760
    %v1623 = vsub.f32 %v1621, %v1622
    %v1624 = vand.u32 %v1623, 4294901760
    %1625 = vmatpush1.msra.mxu0 %v1624
    %1626 = vmatprep.subr.mxu0 0.0
    %v1627 = vand.u32 %v1402, 4294901760
    %v1628 = vsub.f32 %v1402, %v1627
    %v1629 = vand.u32 %v1628, 4294901760
    %v1630 = vsub.f32 %v1628, %v1629
    %v1631 = vand.u32 %v1630, 4294901760
    %1632 = vmatpush1.msra.mxu0 %v1631
    %1633 = vmatprep.subr.mxu0 0.0
    %v1634 = vand.u32 %v1403, 4294901760
    %v1635 = vsub.f32 %v1403, %v1634
    %v1636 = vand.u32 %v1635, 4294901760
    %v1637 = vsub.f32 %v1635, %v1636
    %v1638 = vand.u32 %v1637, 4294901760
    %1639 = vmatpush1.msra.mxu0 %v1638
    %1640 = vmatprep.subr.mxu0 0.0
    %v1641 = vand.u32 %v1404, 4294901760
    %v1642 = vsub.f32 %v1404, %v1641
    %v1643 = vand.u32 %v1642, 4294901760
    %v1644 = vsub.f32 %v1642, %v1643
    %v1645 = vand.u32 %v1644, 4294901760
    %1646 = vmatpush1.msra.mxu0 %v1645
    %1647 = vmatprep.subr.mxu0 0.0
    %v1648 = vand.u32 %v1405, 4294901760
    %v1649 = vsub.f32 %v1405, %v1648
    %v1650 = vand.u32 %v1649, 4294901760
    %v1651 = vsub.f32 %v1649, %v1650
    %v1652 = vand.u32 %v1651, 4294901760
    %1653 = vmatpush1.msra.mxu0 %v1652
    %1654 = vmatprep.subr.mxu0 0.0
    %v1655 = vand.u32 %v1406, 4294901760
    %v1656 = vsub.f32 %v1406, %v1655
    %v1657 = vand.u32 %v1656, 4294901760
    %v1658 = vsub.f32 %v1656, %v1657
    %v1659 = vand.u32 %v1658, 4294901760
    %1660 = vmatpush1.msra.mxu0 %v1659
    %1661 = vmatprep.subr.mxu0 0.0
    %v1662 = vand.u32 %v1407, 4294901760
    %v1663 = vsub.f32 %v1407, %v1662
    %v1664 = vand.u32 %v1663, 4294901760
    %v1665 = vsub.f32 %v1663, %v1664
    %v1666 = vand.u32 %v1665, 4294901760
    %1667 = vmatpush1.msra.mxu0 %v1666
    %1668 = vmatprep.subr.mxu0 0.0
    %v1669 = vand.u32 %v1408, 4294901760
    %v1670 = vsub.f32 %v1408, %v1669
    %v1671 = vand.u32 %v1670, 4294901760
    %v1672 = vsub.f32 %v1670, %v1671
    %v1673 = vand.u32 %v1672, 4294901760
    %1674 = vmatpush1.msra.mxu0 %v1673
    %1675 = vmatprep.subr.mxu0 0.0
    %v1676 = vand.u32 %v1409, 4294901760
    %v1677 = vsub.f32 %v1409, %v1676
    %v1678 = vand.u32 %v1677, 4294901760
    %v1679 = vsub.f32 %v1677, %v1678
    %v1680 = vand.u32 %v1679, 4294901760
    %1681 = vmatpush1.msra.mxu0 %v1680
    %1682 = vmatprep.subr.mxu0 0.0
    %v1683 = vand.u32 %v1410, 4294901760
    %v1684 = vsub.f32 %v1410, %v1683
    %v1685 = vand.u32 %v1684, 4294901760
    %v1686 = vsub.f32 %v1684, %v1685
    %v1687 = vand.u32 %v1686, 4294901760
    %1688 = vmatpush1.msra.mxu0 %v1687
    %1689 = vmatprep.subr.mxu0 0.0
    %v1690 = vand.u32 %v1411, 4294901760
    %v1691 = vsub.f32 %v1411, %v1690
    %v1692 = vand.u32 %v1691, 4294901760
    %v1693 = vsub.f32 %v1691, %v1692
    %v1694 = vand.u32 %v1693, 4294901760
    %1695 = vmatpush1.msra.mxu0 %v1694
    %1696 = vmatprep.subr.mxu0 0.0
    %v1697 = vand.u32 %v1412, 4294901760
    %v1698 = vsub.f32 %v1412, %v1697
    %v1699 = vand.u32 %v1698, 4294901760
    %v1700 = vsub.f32 %v1698, %v1699
    %v1701 = vand.u32 %v1700, 4294901760
    %1702 = vmatpush1.msra.mxu0 %v1701
    %1703 = vmatprep.subr.mxu0 0.0
    %v1704 = vand.u32 %v1413, 4294901760
    %v1705 = vsub.f32 %v1413, %v1704
    %v1706 = vand.u32 %v1705, 4294901760
    %v1707 = vsub.f32 %v1705, %v1706
    %v1708 = vand.u32 %v1707, 4294901760
    %1709 = vmatpush1.msra.mxu0 %v1708
    %1710 = vmatprep.subr.mxu0 0.0
    %v1711 = vand.u32 %v1414, 4294901760
    %v1712 = vsub.f32 %v1414, %v1711
    %v1713 = vand.u32 %v1712, 4294901760
    %v1714 = vsub.f32 %v1712, %v1713
    %v1715 = vand.u32 %v1714, 4294901760
    %1716 = vmatpush1.msra.mxu0 %v1715
    %1717 = vmatprep.subr.mxu0 0.0
    %v1718 = vand.u32 %v1415, 4294901760
    %v1719 = vsub.f32 %v1415, %v1718
    %v1720 = vand.u32 %v1719, 4294901760
    %v1721 = vsub.f32 %v1719, %v1720
    %v1722 = vand.u32 %v1721, 4294901760
    %1723 = vmatpush1.msra.mxu0 %v1722
    %1724 = vmatprep.subr.mxu0 0.0
    %v1725 = vand.u32 %v1416, 4294901760
    %v1726 = vsub.f32 %v1416, %v1725
    %v1727 = vand.u32 %v1726, 4294901760
    %v1728 = vsub.f32 %v1726, %v1727
    %v1729 = vand.u32 %v1728, 4294901760
    %1730 = vmatpush1.msra.mxu0 %v1729
    %1731 = vmatprep.subr.mxu0 0.0
    %v1732 = vand.u32 %v1417, 4294901760
    %v1733 = vsub.f32 %v1417, %v1732
    %v1734 = vand.u32 %v1733, 4294901760
    %v1735 = vsub.f32 %v1733, %v1734
    %v1736 = vand.u32 %v1735, 4294901760
    %1737 = vmatpush1.msra.mxu0 %v1736
    %1738 = vmatprep.subr.mxu0 0.0
    %v1739 = vand.u32 %v1418, 4294901760
    %v1740 = vsub.f32 %v1418, %v1739
    %v1741 = vand.u32 %v1740, 4294901760
    %v1742 = vsub.f32 %v1740, %v1741
    %v1743 = vand.u32 %v1742, 4294901760
    %1744 = vmatpush1.msra.mxu0 %v1743
    %1745 = vmatprep.subr.mxu0 0.0
    %v1746 = vand.u32 %v1419, 4294901760
    %v1747 = vsub.f32 %v1419, %v1746
    %v1748 = vand.u32 %v1747, 4294901760
    %v1749 = vsub.f32 %v1747, %v1748
    %v1750 = vand.u32 %v1749, 4294901760
    %1751 = vmatpush1.msra.mxu0 %v1750
    %1752 = vmatprep.subr.mxu0 0.0
    %v1753 = vand.u32 %v1420, 4294901760
    %v1754 = vsub.f32 %v1420, %v1753
    %v1755 = vand.u32 %v1754, 4294901760
    %v1756 = vsub.f32 %v1754, %v1755
    %v1757 = vand.u32 %v1756, 4294901760
    %1758 = vmatpush1.msra.mxu0 %v1757
    %1759 = vmatprep.subr.mxu0 0.0
    %v1760 = vand.u32 %v1421, 4294901760
    %v1761 = vsub.f32 %v1421, %v1760
    %v1762 = vand.u32 %v1761, 4294901760
    %v1763 = vsub.f32 %v1761, %v1762
    %v1764 = vand.u32 %v1763, 4294901760
    %1765 = vmatpush1.msra.mxu0 %v1764
    %v1766 = vand.u32 %v57, 4294901760
    %1767 = vmatprep.mubr.f32.mxu0 %v1766
    %v1768 = vand.u32 %v1389, 4294901760
    %1769 = vmatmul.mubr.f32.gmra.mrb[0].mxu0 %v1768
    %v1770 = vpop.f32.mrb[0].mxu0
    %v1771 = vadd.f32 %v1539, %v1770
    %v1772 = vpop.f32.mrb[0].mxu0
    %1773 = vdwg.mxu0
    %1774 = vmatprep.subr.mxu0 0.0
    %v1775 = vand.u32 %v1390, 4294901760
    %v1776 = vsub.f32 %v1390, %v1775
    %1777 = vmatpush1.msra.mxu0 %v1776
    %1778 = vmatprep.subr.mxu0 0.0
    %v1779 = vand.u32 %v1391, 4294901760
    %v1780 = vsub.f32 %v1391, %v1779
    %1781 = vmatpush1.msra.mxu0 %v1780
    %1782 = vmatprep.subr.mxu0 0.0
    %v1783 = vand.u32 %v1392, 4294901760
    %v1784 = vsub.f32 %v1392, %v1783
    %1785 = vmatpush1.msra.mxu0 %v1784
    %1786 = vmatprep.subr.mxu0 0.0
    %v1787 = vand.u32 %v1393, 4294901760
    %v1788 = vsub.f32 %v1393, %v1787
    %1789 = vmatpush1.msra.mxu0 %v1788
    %1790 = vmatprep.subr.mxu0 0.0
    %v1791 = vand.u32 %v1394, 4294901760
    %v1792 = vsub.f32 %v1394, %v1791
    %1793 = vmatpush1.msra.mxu0 %v1792
    %1794 = vmatprep.subr.mxu0 0.0
    %v1795 = vand.u32 %v1395, 4294901760
    %v1796 = vsub.f32 %v1395, %v1795
    %1797 = vmatpush1.msra.mxu0 %v1796
    %1798 = vmatprep.subr.mxu0 0.0
    %v1799 = vand.u32 %v1396, 4294901760
    %v1800 = vsub.f32 %v1396, %v1799
    %1801 = vmatpush1.msra.mxu0 %v1800
    %1802 = vmatprep.subr.mxu0 0.0
    %v1803 = vand.u32 %v1397, 4294901760
    %v1804 = vsub.f32 %v1397, %v1803
    %1805 = vmatpush1.msra.mxu0 %v1804
    %1806 = vmatprep.subr.mxu0 0.0
    %v1807 = vand.u32 %v1398, 4294901760
    %v1808 = vsub.f32 %v1398, %v1807
    %1809 = vmatpush1.msra.mxu0 %v1808
    %1810 = vmatprep.subr.mxu0 0.0
    %v1811 = vand.u32 %v1399, 4294901760
    %v1812 = vsub.f32 %v1399, %v1811
    %1813 = vmatpush1.msra.mxu0 %v1812
    %1814 = vmatprep.subr.mxu0 0.0
    %v1815 = vand.u32 %v1400, 4294901760
    %v1816 = vsub.f32 %v1400, %v1815
    %1817 = vmatpush1.msra.mxu0 %v1816
    %1818 = vmatprep.subr.mxu0 0.0
    %v1819 = vand.u32 %v1401, 4294901760
    %v1820 = vsub.f32 %v1401, %v1819
    %1821 = vmatpush1.msra.mxu0 %v1820
    %1822 = vmatprep.subr.mxu0 0.0
    %v1823 = vand.u32 %v1402, 4294901760
    %v1824 = vsub.f32 %v1402, %v1823
    %1825 = vmatpush1.msra.mxu0 %v1824
    %1826 = vmatprep.subr.mxu0 0.0
    %v1827 = vand.u32 %v1403, 4294901760
    %v1828 = vsub.f32 %v1403, %v1827
    %1829 = vmatpush1.msra.mxu0 %v1828
    %1830 = vmatprep.subr.mxu0 0.0
    %v1831 = vand.u32 %v1404, 4294901760
    %v1832 = vsub.f32 %v1404, %v1831
    %1833 = vmatpush1.msra.mxu0 %v1832
    %1834 = vmatprep.subr.mxu0 0.0
    %v1835 = vand.u32 %v1405, 4294901760
    %v1836 = vsub.f32 %v1405, %v1835
    %1837 = vmatpush1.msra.mxu0 %v1836
    %1838 = vmatprep.subr.mxu0 0.0
    %v1839 = vand.u32 %v1406, 4294901760
    %v1840 = vsub.f32 %v1406, %v1839
    %1841 = vmatpush1.msra.mxu0 %v1840
    %1842 = vmatprep.subr.mxu0 0.0
    %v1843 = vand.u32 %v1407, 4294901760
    %v1844 = vsub.f32 %v1407, %v1843
    %1845 = vmatpush1.msra.mxu0 %v1844
    %1846 = vmatprep.subr.mxu0 0.0
    %v1847 = vand.u32 %v1408, 4294901760
    %v1848 = vsub.f32 %v1408, %v1847
    %1849 = vmatpush1.msra.mxu0 %v1848
    %1850 = vmatprep.subr.mxu0 0.0
    %v1851 = vand.u32 %v1409, 4294901760
    %v1852 = vsub.f32 %v1409, %v1851
    %1853 = vmatpush1.msra.mxu0 %v1852
    %1854 = vmatprep.subr.mxu0 0.0
    %v1855 = vand.u32 %v1410, 4294901760
    %v1856 = vsub.f32 %v1410, %v1855
    %1857 = vmatpush1.msra.mxu0 %v1856
    %1858 = vmatprep.subr.mxu0 0.0
    %v1859 = vand.u32 %v1411, 4294901760
    %v1860 = vsub.f32 %v1411, %v1859
    %1861 = vmatpush1.msra.mxu0 %v1860
    %1862 = vmatprep.subr.mxu0 0.0
    %v1863 = vand.u32 %v1412, 4294901760
    %v1864 = vsub.f32 %v1412, %v1863
    %1865 = vmatpush1.msra.mxu0 %v1864
    %1866 = vmatprep.subr.mxu0 0.0
    %v1867 = vand.u32 %v1413, 4294901760
    %v1868 = vsub.f32 %v1413, %v1867
    %1869 = vmatpush1.msra.mxu0 %v1868
    %1870 = vmatprep.subr.mxu0 0.0
    %v1871 = vand.u32 %v1414, 4294901760
    %v1872 = vsub.f32 %v1414, %v1871
    %1873 = vmatpush1.msra.mxu0 %v1872
    %1874 = vmatprep.subr.mxu0 0.0
    %v1875 = vand.u32 %v1415, 4294901760
    %v1876 = vsub.f32 %v1415, %v1875
    %1877 = vmatpush1.msra.mxu0 %v1876
    %1878 = vmatprep.subr.mxu0 0.0
    %v1879 = vand.u32 %v1416, 4294901760
    %v1880 = vsub.f32 %v1416, %v1879
    %1881 = vmatpush1.msra.mxu0 %v1880
    %1882 = vmatprep.subr.mxu0 0.0
    %v1883 = vand.u32 %v1417, 4294901760
    %v1884 = vsub.f32 %v1417, %v1883
    %1885 = vmatpush1.msra.mxu0 %v1884
    %1886 = vmatprep.subr.mxu0 0.0
    %v1887 = vand.u32 %v1418, 4294901760
    %v1888 = vsub.f32 %v1418, %v1887
    %1889 = vmatpush1.msra.mxu0 %v1888
    %1890 = vmatprep.subr.mxu0 0.0
    %v1891 = vand.u32 %v1419, 4294901760
    %v1892 = vsub.f32 %v1419, %v1891
    %1893 = vmatpush1.msra.mxu0 %v1892
    %1894 = vmatprep.subr.mxu0 0.0
    %v1895 = vand.u32 %v1420, 4294901760
    %v1896 = vsub.f32 %v1420, %v1895
    %1897 = vmatpush1.msra.mxu0 %v1896
    %1898 = vmatprep.subr.mxu0 0.0
    %v1899 = vand.u32 %v1421, 4294901760
    %v1900 = vsub.f32 %v1421, %v1899
    %1901 = vmatpush1.msra.mxu0 %v1900
    %v1902 = vand.u32 %v57, 4294901760
    %v1903 = vsub.f32 %v57, %v1902
    %1904 = vmatprep.mubr.f32.mxu0 %v1903
    %v1905 = vand.u32 %v1389, 4294901760
    %v1906 = vsub.f32 %v1389, %v1905
    %1907 = vmatmul.mubr.f32.gmra.mrb[0].mxu0 %v1906
    %v1908 = vpop.f32.mrb[0].mxu0
    %v1909 = vadd.f32 %v1771, %v1908
    %v1910 = vpop.f32.mrb[0].mxu0
    %1911 = vdwg.mxu0
    %1912 = vmatprep.subr.mxu0 0.0
    %v1913 = vand.u32 %v1390, 4294901760
    %1914 = vmatpush1.msra.mxu0 %v1913
    %1915 = vmatprep.subr.mxu0 0.0
    %v1916 = vand.u32 %v1391, 4294901760
    %1917 = vmatpush1.msra.mxu0 %v1916
    %1918 = vmatprep.subr.mxu0 0.0
    %v1919 = vand.u32 %v1392, 4294901760
    %1920 = vmatpush1.msra.mxu0 %v1919
    %1921 = vmatprep.subr.mxu0 0.0
    %v1922 = vand.u32 %v1393, 4294901760
    %1923 = vmatpush1.msra.mxu0 %v1922
    %1924 = vmatprep.subr.mxu0 0.0
    %v1925 = vand.u32 %v1394, 4294901760
    %1926 = vmatpush1.msra.mxu0 %v1925
    %1927 = vmatprep.subr.mxu0 0.0
    %v1928 = vand.u32 %v1395, 4294901760
    %1929 = vmatpush1.msra.mxu0 %v1928
    %1930 = vmatprep.subr.mxu0 0.0
    %v1931 = vand.u32 %v1396, 4294901760
    %1932 = vmatpush1.msra.mxu0 %v1931
    %1933 = vmatprep.subr.mxu0 0.0
    %v1934 = vand.u32 %v1397, 4294901760
    %1935 = vmatpush1.msra.mxu0 %v1934
    %1936 = vmatprep.subr.mxu0 0.0
    %v1937 = vand.u32 %v1398, 4294901760
    %1938 = vmatpush1.msra.mxu0 %v1937
    %1939 = vmatprep.subr.mxu0 0.0
    %v1940 = vand.u32 %v1399, 4294901760
    %1941 = vmatpush1.msra.mxu0 %v1940
    %1942 = vmatprep.subr.mxu0 0.0
    %v1943 = vand.u32 %v1400, 4294901760
    %1944 = vmatpush1.msra.mxu0 %v1943
    %1945 = vmatprep.subr.mxu0 0.0
    %v1946 = vand.u32 %v1401, 4294901760
    %1947 = vmatpush1.msra.mxu0 %v1946
    %1948 = vmatprep.subr.mxu0 0.0
    %v1949 = vand.u32 %v1402, 4294901760
    %1950 = vmatpush1.msra.mxu0 %v1949
    %1951 = vmatprep.subr.mxu0 0.0
    %v1952 = vand.u32 %v1403, 4294901760
    %1953 = vmatpush1.msra.mxu0 %v1952
    %1954 = vmatprep.subr.mxu0 0.0
    %v1955 = vand.u32 %v1404, 4294901760
    %1956 = vmatpush1.msra.mxu0 %v1955
    %1957 = vmatprep.subr.mxu0 0.0
    %v1958 = vand.u32 %v1405, 4294901760
    %1959 = vmatpush1.msra.mxu0 %v1958
    %1960 = vmatprep.subr.mxu0 0.0
    %v1961 = vand.u32 %v1406, 4294901760
    %1962 = vmatpush1.msra.mxu0 %v1961
    %1963 = vmatprep.subr.mxu0 0.0
    %v1964 = vand.u32 %v1407, 4294901760
    %1965 = vmatpush1.msra.mxu0 %v1964
    %1966 = vmatprep.subr.mxu0 0.0
    %v1967 = vand.u32 %v1408, 4294901760
    %1968 = vmatpush1.msra.mxu0 %v1967
    %1969 = vmatprep.subr.mxu0 0.0
    %v1970 = vand.u32 %v1409, 4294901760
    %1971 = vmatpush1.msra.mxu0 %v1970
    %1972 = vmatprep.subr.mxu0 0.0
    %v1973 = vand.u32 %v1410, 4294901760
    %1974 = vmatpush1.msra.mxu0 %v1973
    %1975 = vmatprep.subr.mxu0 0.0
    %v1976 = vand.u32 %v1411, 4294901760
    %1977 = vmatpush1.msra.mxu0 %v1976
    %1978 = vmatprep.subr.mxu0 0.0
    %v1979 = vand.u32 %v1412, 4294901760
    %1980 = vmatpush1.msra.mxu0 %v1979
    %1981 = vmatprep.subr.mxu0 0.0
    %v1982 = vand.u32 %v1413, 4294901760
    %1983 = vmatpush1.msra.mxu0 %v1982
    %1984 = vmatprep.subr.mxu0 0.0
    %v1985 = vand.u32 %v1414, 4294901760
    %1986 = vmatpush1.msra.mxu0 %v1985
    %1987 = vmatprep.subr.mxu0 0.0
    %v1988 = vand.u32 %v1415, 4294901760
    %1989 = vmatpush1.msra.mxu0 %v1988
    %1990 = vmatprep.subr.mxu0 0.0
    %v1991 = vand.u32 %v1416, 4294901760
    %1992 = vmatpush1.msra.mxu0 %v1991
    %1993 = vmatprep.subr.mxu0 0.0
    %v1994 = vand.u32 %v1417, 4294901760
    %1995 = vmatpush1.msra.mxu0 %v1994
    %1996 = vmatprep.subr.mxu0 0.0
    %v1997 = vand.u32 %v1418, 4294901760
    %1998 = vmatpush1.msra.mxu0 %v1997
    %1999 = vmatprep.subr.mxu0 0.0
    %v2000 = vand.u32 %v1419, 4294901760
    %2001 = vmatpush1.msra.mxu0 %v2000
    %2002 = vmatprep.subr.mxu0 0.0
    %v2003 = vand.u32 %v1420, 4294901760
    %2004 = vmatpush1.msra.mxu0 %v2003
    %2005 = vmatprep.subr.mxu0 0.0
    %v2006 = vand.u32 %v1421, 4294901760
    %2007 = vmatpush1.msra.mxu0 %v2006
    %v2008 = vand.u32 %v57, 4294901760
    %v2009 = vsub.f32 %v57, %v2008
    %v2010 = vand.u32 %v2009, 4294901760
    %2011 = vmatprep.mubr.f32.mxu0 %v2010
    %v2012 = vand.u32 %v1389, 4294901760
    %v2013 = vsub.f32 %v1389, %v2012
    %v2014 = vand.u32 %v2013, 4294901760
    %2015 = vmatmul.mubr.f32.gmra.mrb[0].mxu0 %v2014
    %v2016 = vpop.f32.mrb[0].mxu0
    %v2017 = vadd.f32 %v1909, %v2016
    %v2018 = vpop.f32.mrb[0].mxu0
    %2019 = vdwg.mxu0
    %2020 = vmatprep.subr.mxu0 0.0
    %v2021 = vand.u32 %v1390, 4294901760
    %v2022 = vsub.f32 %v1390, %v2021
    %v2023 = vand.u32 %v2022, 4294901760
    %2024 = vmatpush1.msra.mxu0 %v2023
    %2025 = vmatprep.subr.mxu0 0.0
    %v2026 = vand.u32 %v1391, 4294901760
    %v2027 = vsub.f32 %v1391, %v2026
    %v2028 = vand.u32 %v2027, 4294901760
    %2029 = vmatpush1.msra.mxu0 %v2028
    %2030 = vmatprep.subr.mxu0 0.0
    %v2031 = vand.u32 %v1392, 4294901760
    %v2032 = vsub.f32 %v1392, %v2031
    %v2033 = vand.u32 %v2032, 4294901760
    %2034 = vmatpush1.msra.mxu0 %v2033
    %2035 = vmatprep.subr.mxu0 0.0
    %v2036 = vand.u32 %v1393, 4294901760
    %v2037 = vsub.f32 %v1393, %v2036
    %v2038 = vand.u32 %v2037, 4294901760
    %2039 = vmatpush1.msra.mxu0 %v2038
    %2040 = vmatprep.subr.mxu0 0.0
    %v2041 = vand.u32 %v1394, 4294901760
    %v2042 = vsub.f32 %v1394, %v2041
    %v2043 = vand.u32 %v2042, 4294901760
    %2044 = vmatpush1.msra.mxu0 %v2043
    %2045 = vmatprep.subr.mxu0 0.0
    %v2046 = vand.u32 %v1395, 4294901760
    %v2047 = vsub.f32 %v1395, %v2046
    %v2048 = vand.u32 %v2047, 4294901760
    %2049 = vmatpush1.msra.mxu0 %v2048
    %2050 = vmatprep.subr.mxu0 0.0
    %v2051 = vand.u32 %v1396, 4294901760
    %v2052 = vsub.f32 %v1396, %v2051
    %v2053 = vand.u32 %v2052, 4294901760
    %2054 = vmatpush1.msra.mxu0 %v2053
    %2055 = vmatprep.subr.mxu0 0.0
    %v2056 = vand.u32 %v1397, 4294901760
    %v2057 = vsub.f32 %v1397, %v2056
    %v2058 = vand.u32 %v2057, 4294901760
    %2059 = vmatpush1.msra.mxu0 %v2058
    %2060 = vmatprep.subr.mxu0 0.0
    %v2061 = vand.u32 %v1398, 4294901760
    %v2062 = vsub.f32 %v1398, %v2061
    %v2063 = vand.u32 %v2062, 4294901760
    %2064 = vmatpush1.msra.mxu0 %v2063
    %2065 = vmatprep.subr.mxu0 0.0
    %v2066 = vand.u32 %v1399, 4294901760
    %v2067 = vsub.f32 %v1399, %v2066
    %v2068 = vand.u32 %v2067, 4294901760
    %2069 = vmatpush1.msra.mxu0 %v2068
    %2070 = vmatprep.subr.mxu0 0.0
    %v2071 = vand.u32 %v1400, 4294901760
    %v2072 = vsub.f32 %v1400, %v2071
    %v2073 = vand.u32 %v2072, 4294901760
    %2074 = vmatpush1.msra.mxu0 %v2073
    %2075 = vmatprep.subr.mxu0 0.0
    %v2076 = vand.u32 %v1401, 4294901760
    %v2077 = vsub.f32 %v1401, %v2076
    %v2078 = vand.u32 %v2077, 4294901760
    %2079 = vmatpush1.msra.mxu0 %v2078
    %2080 = vmatprep.subr.mxu0 0.0
    %v2081 = vand.u32 %v1402, 4294901760
    %v2082 = vsub.f32 %v1402, %v2081
    %v2083 = vand.u32 %v2082, 4294901760
    %2084 = vmatpush1.msra.mxu0 %v2083
    %2085 = vmatprep.subr.mxu0 0.0
    %v2086 = vand.u32 %v1403, 4294901760
    %v2087 = vsub.f32 %v1403, %v2086
    %v2088 = vand.u32 %v2087, 4294901760
    %2089 = vmatpush1.msra.mxu0 %v2088
    %2090 = vmatprep.subr.mxu0 0.0
    %v2091 = vand.u32 %v1404, 4294901760
    %v2092 = vsub.f32 %v1404, %v2091
    %v2093 = vand.u32 %v2092, 4294901760
    %2094 = vmatpush1.msra.mxu0 %v2093
    %2095 = vmatprep.subr.mxu0 0.0
    %v2096 = vand.u32 %v1405, 4294901760
    %v2097 = vsub.f32 %v1405, %v2096
    %v2098 = vand.u32 %v2097, 4294901760
    %2099 = vmatpush1.msra.mxu0 %v2098
    %2100 = vmatprep.subr.mxu0 0.0
    %v2101 = vand.u32 %v1406, 4294901760
    %v2102 = vsub.f32 %v1406, %v2101
    %v2103 = vand.u32 %v2102, 4294901760
    %2104 = vmatpush1.msra.mxu0 %v2103
    %2105 = vmatprep.subr.mxu0 0.0
    %v2106 = vand.u32 %v1407, 4294901760
    %v2107 = vsub.f32 %v1407, %v2106
    %v2108 = vand.u32 %v2107, 4294901760
    %2109 = vmatpush1.msra.mxu0 %v2108
    %2110 = vmatprep.subr.mxu0 0.0
    %v2111 = vand.u32 %v1408, 4294901760
    %v2112 = vsub.f32 %v1408, %v2111
    %v2113 = vand.u32 %v2112, 4294901760
    %2114 = vmatpush1.msra.mxu0 %v2113
    %2115 = vmatprep.subr.mxu0 0.0
    %v2116 = vand.u32 %v1409, 4294901760
    %v2117 = vsub.f32 %v1409, %v2116
    %v2118 = vand.u32 %v2117, 4294901760
    %2119 = vmatpush1.msra.mxu0 %v2118
    %2120 = vmatprep.subr.mxu0 0.0
    %v2121 = vand.u32 %v1410, 4294901760
    %v2122 = vsub.f32 %v1410, %v2121
    %v2123 = vand.u32 %v2122, 4294901760
    %2124 = vmatpush1.msra.mxu0 %v2123
    %2125 = vmatprep.subr.mxu0 0.0
    %v2126 = vand.u32 %v1411, 4294901760
    %v2127 = vsub.f32 %v1411, %v2126
    %v2128 = vand.u32 %v2127, 4294901760
    %2129 = vmatpush1.msra.mxu0 %v2128
    %2130 = vmatprep.subr.mxu0 0.0
    %v2131 = vand.u32 %v1412, 4294901760
    %v2132 = vsub.f32 %v1412, %v2131
    %v2133 = vand.u32 %v2132, 4294901760
    %2134 = vmatpush1.msra.mxu0 %v2133
    %2135 = vmatprep.subr.mxu0 0.0
    %v2136 = vand.u32 %v1413, 4294901760
    %v2137 = vsub.f32 %v1413, %v2136
    %v2138 = vand.u32 %v2137, 4294901760
    %2139 = vmatpush1.msra.mxu0 %v2138
    %2140 = vmatprep.subr.mxu0 0.0
    %v2141 = vand.u32 %v1414, 4294901760
    %v2142 = vsub.f32 %v1414, %v2141
    %v2143 = vand.u32 %v2142, 4294901760
    %2144 = vmatpush1.msra.mxu0 %v2143
    %2145 = vmatprep.subr.mxu0 0.0
    %v2146 = vand.u32 %v1415, 4294901760
    %v2147 = vsub.f32 %v1415, %v2146
    %v2148 = vand.u32 %v2147, 4294901760
    %2149 = vmatpush1.msra.mxu0 %v2148
    %2150 = vmatprep.subr.mxu0 0.0
    %v2151 = vand.u32 %v1416, 4294901760
    %v2152 = vsub.f32 %v1416, %v2151
    %v2153 = vand.u32 %v2152, 4294901760
    %2154 = vmatpush1.msra.mxu0 %v2153
    %2155 = vmatprep.subr.mxu0 0.0
    %v2156 = vand.u32 %v1417, 4294901760
    %v2157 = vsub.f32 %v1417, %v2156
    %v2158 = vand.u32 %v2157, 4294901760
    %2159 = vmatpush1.msra.mxu0 %v2158
    %2160 = vmatprep.subr.mxu0 0.0
    %v2161 = vand.u32 %v1418, 4294901760
    %v2162 = vsub.f32 %v1418, %v2161
    %v2163 = vand.u32 %v2162, 4294901760
    %2164 = vmatpush1.msra.mxu0 %v2163
    %2165 = vmatprep.subr.mxu0 0.0
    %v2166 = vand.u32 %v1419, 4294901760
    %v2167 = vsub.f32 %v1419, %v2166
    %v2168 = vand.u32 %v2167, 4294901760
    %2169 = vmatpush1.msra.mxu0 %v2168
    %2170 = vmatprep.subr.mxu0 0.0
    %v2171 = vand.u32 %v1420, 4294901760
    %v2172 = vsub.f32 %v1420, %v2171
    %v2173 = vand.u32 %v2172, 4294901760
    %2174 = vmatpush1.msra.mxu0 %v2173
    %2175 = vmatprep.subr.mxu0 0.0
    %v2176 = vand.u32 %v1421, 4294901760
    %v2177 = vsub.f32 %v1421, %v2176
    %v2178 = vand.u32 %v2177, 4294901760
    %2179 = vmatpush1.msra.mxu0 %v2178
    %v2180 = vand.u32 %v57, 4294901760
    %2181 = vmatprep.mubr.f32.mxu0 %v2180
    %v2182 = vand.u32 %v1389, 4294901760
    %2183 = vmatmul.mubr.f32.gmra.mrb[0].mxu0 %v2182
    %v2184 = vpop.f32.mrb[0].mxu0
    %v2185 = vadd.f32 %v2017, %v2184
    %v2186 = vpop.f32.mrb[0].mxu0
    %2187 = vdwg.mxu0
    %2188 = vmatprep.subr.mxu0 0.0
    %v2189 = vand.u32 %v1390, 4294901760
    %2190 = vmatpush1.msra.mxu0 %v2189
    %2191 = vmatprep.subr.mxu0 0.0
    %v2192 = vand.u32 %v1391, 4294901760
    %2193 = vmatpush1.msra.mxu0 %v2192
    %2194 = vmatprep.subr.mxu0 0.0
    %v2195 = vand.u32 %v1392, 4294901760
    %2196 = vmatpush1.msra.mxu0 %v2195
    %2197 = vmatprep.subr.mxu0 0.0
    %v2198 = vand.u32 %v1393, 4294901760
    %2199 = vmatpush1.msra.mxu0 %v2198
    %2200 = vmatprep.subr.mxu0 0.0
    %v2201 = vand.u32 %v1394, 4294901760
    %2202 = vmatpush1.msra.mxu0 %v2201
    %2203 = vmatprep.subr.mxu0 0.0
    %v2204 = vand.u32 %v1395, 4294901760
    %2205 = vmatpush1.msra.mxu0 %v2204
    %2206 = vmatprep.subr.mxu0 0.0
    %v2207 = vand.u32 %v1396, 4294901760
    %2208 = vmatpush1.msra.mxu0 %v2207
    %2209 = vmatprep.subr.mxu0 0.0
    %v2210 = vand.u32 %v1397, 4294901760
    %2211 = vmatpush1.msra.mxu0 %v2210
    %2212 = vmatprep.subr.mxu0 0.0
    %v2213 = vand.u32 %v1398, 4294901760
    %2214 = vmatpush1.msra.mxu0 %v2213
    %2215 = vmatprep.subr.mxu0 0.0
    %v2216 = vand.u32 %v1399, 4294901760
    %2217 = vmatpush1.msra.mxu0 %v2216
    %2218 = vmatprep.subr.mxu0 0.0
    %v2219 = vand.u32 %v1400, 4294901760
    %2220 = vmatpush1.msra.mxu0 %v2219
    %2221 = vmatprep.subr.mxu0 0.0
    %v2222 = vand.u32 %v1401, 4294901760
    %2223 = vmatpush1.msra.mxu0 %v2222
    %2224 = vmatprep.subr.mxu0 0.0
    %v2225 = vand.u32 %v1402, 4294901760
    %2226 = vmatpush1.msra.mxu0 %v2225
    %2227 = vmatprep.subr.mxu0 0.0
    %v2228 = vand.u32 %v1403, 4294901760
    %2229 = vmatpush1.msra.mxu0 %v2228
    %2230 = vmatprep.subr.mxu0 0.0
    %v2231 = vand.u32 %v1404, 4294901760
    %2232 = vmatpush1.msra.mxu0 %v2231
    %2233 = vmatprep.subr.mxu0 0.0
    %v2234 = vand.u32 %v1405, 4294901760
    %2235 = vmatpush1.msra.mxu0 %v2234
    %2236 = vmatprep.subr.mxu0 0.0
    %v2237 = vand.u32 %v1406, 4294901760
    %2238 = vmatpush1.msra.mxu0 %v2237
    %2239 = vmatprep.subr.mxu0 0.0
    %v2240 = vand.u32 %v1407, 4294901760
    %2241 = vmatpush1.msra.mxu0 %v2240
    %2242 = vmatprep.subr.mxu0 0.0
    %v2243 = vand.u32 %v1408, 4294901760
    %2244 = vmatpush1.msra.mxu0 %v2243
    %2245 = vmatprep.subr.mxu0 0.0
    %v2246 = vand.u32 %v1409, 4294901760
    %2247 = vmatpush1.msra.mxu0 %v2246
    %2248 = vmatprep.subr.mxu0 0.0
    %v2249 = vand.u32 %v1410, 4294901760
    %2250 = vmatpush1.msra.mxu0 %v2249
    %2251 = vmatprep.subr.mxu0 0.0
    %v2252 = vand.u32 %v1411, 4294901760
    %2253 = vmatpush1.msra.mxu0 %v2252
    %2254 = vmatprep.subr.mxu0 0.0
    %v2255 = vand.u32 %v1412, 4294901760
    %2256 = vmatpush1.msra.mxu0 %v2255
    %2257 = vmatprep.subr.mxu0 0.0
    %v2258 = vand.u32 %v1413, 4294901760
    %2259 = vmatpush1.msra.mxu0 %v2258
    %2260 = vmatprep.subr.mxu0 0.0
    %v2261 = vand.u32 %v1414, 4294901760
    %2262 = vmatpush1.msra.mxu0 %v2261
    %2263 = vmatprep.subr.mxu0 0.0
    %v2264 = vand.u32 %v1415, 4294901760
    %2265 = vmatpush1.msra.mxu0 %v2264
    %2266 = vmatprep.subr.mxu0 0.0
    %v2267 = vand.u32 %v1416, 4294901760
    %2268 = vmatpush1.msra.mxu0 %v2267
    %2269 = vmatprep.subr.mxu0 0.0
    %v2270 = vand.u32 %v1417, 4294901760
    %2271 = vmatpush1.msra.mxu0 %v2270
    %2272 = vmatprep.subr.mxu0 0.0
    %v2273 = vand.u32 %v1418, 4294901760
    %2274 = vmatpush1.msra.mxu0 %v2273
    %2275 = vmatprep.subr.mxu0 0.0
    %v2276 = vand.u32 %v1419, 4294901760
    %2277 = vmatpush1.msra.mxu0 %v2276
    %2278 = vmatprep.subr.mxu0 0.0
    %v2279 = vand.u32 %v1420, 4294901760
    %2280 = vmatpush1.msra.mxu0 %v2279
    %2281 = vmatprep.subr.mxu0 0.0
    %v2282 = vand.u32 %v1421, 4294901760
    %2283 = vmatpush1.msra.mxu0 %v2282
    %v2284 = vand.u32 %v57, 4294901760
    %2285 = vmatprep.mubr.f32.mxu0 %v2284
    %v2286 = vand.u32 %v1389, 4294901760
    %2287 = vmatmul.mubr.f32.gmra.mrb[0].mxu0 %v2286
    %v2288 = vpop.f32.mrb[0].mxu0
    %v2289 = vadd.f32 %v2185, %v2288
    %v2290 = vpop.f32.mrb[0].mxu0
    %2291 = vdwg.mxu0
    %2292 = vst [vmem:[#allocation8] sm:$0xff] %v2289
    // Predicated region
    $region30: #{tpu_custom_call.1} parent=1 // pred_check
      _
    $region31: #{tpu_custom_call.1} parent=1 // pred_check_branch
      %2294 = sbr.rel (0) target = $region33
    $region32: #{tpu_custom_call.1} parent=1 // pred_region
      %s2296 = ssub.s32 128, 128
      %2297 = vsyncadd [#allocation4], %s2296
      %s2299 = sshll.u32 [#allocation8], 4
      %s2300 = int_to_ptr.vmem [resolvable:$true] %s2299
      %2302 = dma.vmem_to_hbm [thread:$0]  %s2300, 128, %s4, [#allocation4]
    $region33: #{tpu_custom_call.1} parent=1 // pred_fallthru
      _
    // Predicated region
    $region34: #{tpu_custom_call.1} parent=1 // pred_check
      _
    $region35: #{tpu_custom_call.1} parent=1 // pred_check_branch
      %2304 = sbr.rel (0) target = $region37
    $region36: #{tpu_custom_call.1} parent=1 // pred_region
      %2305 = dma.done [#allocation4], 128
    $region37: #{tpu_custom_call.1} parent=1 // pred_fallthru
      _
    %2306 = vsyncpa [#allocation3], 1
    %2307 = vsyncpa [#allocation6], 1
    %2308 = vsyncpa [#allocation4], 1

</llo_original>
